<compile_context>
chip_gen: v5e
topology: v5e:2x2
jax: 0.10.0
libtpu: 0.0.40
codegen_flags: <defaults>
</compile_context>

<pallas_src>
import numpy as np
import jax
import jax.numpy as jnp
from jax.experimental import pallas as pl
from jax.experimental.pallas import tpu as pltpu


# ---------------------------------------------------------------------------
# Kernel
# ---------------------------------------------------------------------------
def position_net_kernel(
    x_ref,                 # (TB, 1)   f32 input scalar per row
    cw1_ref, cb1_ref,      # fused [w1|sw1] (1, 128) f32, [b1|sb1] (1, 128) f32  (VPU path)
    cw2_ref, cb2_ref,      # fused [W|Ws] (64, 256)  bf16, bias (1, 256)  f32
    cw3_ref, cb3_ref,      # fused       (128, 512)  bf16, bias (1, 512)  f32
    cw4_ref, cb4_ref,      # fused       (256, 1024) bf16, bias (1, 1024) f32
    w5_ref, b5_ref,        # lane-padded final linear (512, 128) bf16, (1, 128) f32
    o_ref,                 # (TB, 128) f32
):
    x = x_ref[...]                                            # (TB, 1) f32

    # ---- block 1: fan_in == 1 -> a K=1 matmul would waste the MXU, so it is a
    #      single fused VPU broadcast multiply (x lane-broadcast exactly once).
    z1 = x * cw1_ref[...] + cb1_ref[...]                      # (TB, 128) f32
    h = jnp.maximum(jnp.sin(z1[:, :64]) + z1[:, 64:], 0.0)    # (TB, 64)  f32

    # ---- blocks 2..4: main + shortcut fused into ONE bf16 MXU matmul per block,
    #      f32 accumulation, f32 epilogue (sin/add/relu).
    def fused_block(h, cw_ref, cb_ref):
        out_f = cw_ref.shape[1] // 2                          # 128 / 256 / 512
        z = jnp.dot(h.astype(jnp.bfloat16), cw_ref[...],
                    preferred_element_type=jnp.float32) + cb_ref[...]
        # first half -> sin path, second half -> shortcut path (lane-aligned split)
        return jnp.maximum(jnp.sin(z[:, :out_f]) + z[:, out_f:], 0.0)

    h = fused_block(h, cw2_ref, cb2_ref)                      # (TB, 128)
    h = fused_block(h, cw3_ref, cb3_ref)                      # (TB, 256)
    h = fused_block(h, cw4_ref, cb4_ref)                      # (TB, 512)

    # ---- final Linear(512 -> out_dim), zero-padded to 128 lanes for dense stores
    y = jnp.dot(h.astype(jnp.bfloat16), w5_ref[...],
                preferred_element_type=jnp.float32) + b5_ref[...]
    o_ref[...] = y.astype(o_ref.dtype)


# ---------------------------------------------------------------------------
# Parameter init (matches Position_Net shapes; SIREN-style distributions)
# ---------------------------------------------------------------------------
DIMS = [1, 64, 128, 256, 512]


def init_params(key, num_vorts):
    out_dim = num_vorts * 2
    params = []
    keys = jax.random.split(key, 32)
    ki = 0

    def uni(k, shape, bound):
        return jax.random.uniform(k, shape, jnp.float32, -bound, bound)

    for li in range(4):
        fan_in, fan_out = DIMS[li], DIMS[li + 1]
        is_first = (li == 0)
        omega_0 = 1.0
        w_bound = (1.0 / fan_in) if is_first else (np.sqrt(6.0 / fan_in) / omega_0)
        w = uni(keys[ki], (fan_in, fan_out), w_bound); ki += 1
        b_bound = 1.0 / np.sqrt(fan_in)
        b = uni(keys[ki], (1, fan_out), b_bound); ki += 1
        sw = uni(keys[ki], (fan_in, fan_out), b_bound); ki += 1
        sb = uni(keys[ki], (1, fan_out), b_bound); ki += 1
        params += [w, b, sw, sb]

    fin = DIMS[-1]
    fbound = 1.0 / np.sqrt(fin)
    w5 = uni(keys[ki], (fin, out_dim), fbound); ki += 1
    b5 = uni(keys[ki], (1, out_dim), fbound); ki += 1
    params += [w5, b5]
    return params


def pack_params(params, out_pad):
    """Fuse main+shortcut weights per block (bf16 for MXU blocks), lane-pad final linear."""
    (w1, b1, sw1, sb1,
     w2, b2, sw2, sb2,
     w3, b3, sw3, sb3,
     w4, b4, sw4, sb4,
     w5, b5) = params

    packed = [jnp.concatenate([w1, sw1], axis=1),                    # (1, 128) f32 (VPU path)
              jnp.concatenate([b1, sb1], axis=1)]                    # (1, 128) f32
    for (w, b, sw, sb) in ((w2, b2, sw2, sb2),
                           (w3, b3, sw3, sb3),
                           (w4, b4, sw4, sb4)):
        packed.append(jnp.concatenate([w, sw], axis=1).astype(jnp.bfloat16))  # (in, 2*out) bf16
        packed.append(jnp.concatenate([b, sb], axis=1))                       # (1, 2*out)  f32

    out_dim = w5.shape[1]
    packed.append(jnp.pad(w5, ((0, 0), (0, out_pad - out_dim))).astype(jnp.bfloat16))
    packed.append(jnp.pad(b5, ((0, 0), (0, out_pad - out_dim))))              # (1, OUT_PAD) f32
    return packed


# ---------------------------------------------------------------------------
# Batch tiling heuristics
# ---------------------------------------------------------------------------
def _round_up(a, m):
    return ((a + m - 1) // m) * m


def _choose_tile(B):
    """Rows per grid step.

    * B <= 256: a single tile (splitting tiny batches would not fill the MXU).
    * B  > 256: at least 2 grid steps (so both v7x TensorCores get work via the
      "parallel" axis) and at most 1024 rows per tile (f32 intermediates stay
      inside the v5e 16 MiB scoped-VMEM default).  Tile = ceil(B/n_tiles) rounded
      to 8, so batch padding waste is < 8*n_tiles rows instead of up to ~41%.
    """
    if B <= 256:
        return max(8, _round_up(B, 8))
    n_tiles = max(2, (B + 1023) // 1024)
    return _round_up((B + n_tiles - 1) // n_tiles, 8)


# ---------------------------------------------------------------------------
# Wrapper
# ---------------------------------------------------------------------------
def position_net_forward(x, params):
    """x: (B, 1) float32 -> (B, num_vorts*2) float32."""
    B = x.shape[0]
    out_dim = params[-1].shape[1]
    out_pad = _round_up(out_dim, 128)                         # lane-dense output width
    packed = pack_params(params, out_pad)

    TB = _choose_tile(B)
    B_pad = _round_up(B, TB)
    x_pad = x if B_pad == B else jnp.pad(x, ((0, B_pad - B), (0, 0)))
    n_tiles = B_pad // TB

    in_specs = [pl.BlockSpec((TB, 1), lambda i: (i, 0))]
    # weights: full-extent blocks with constant index_map -> DMA'd once, stay resident
    for p in packed:
        in_specs.append(pl.BlockSpec(p.shape, lambda i: (0, 0)))
    out_spec = pl.BlockSpec((TB, out_pad), lambda i: (i, 0))

    out_full = pl.pallas_call(
        position_net_kernel,
        out_shape=jax.ShapeDtypeStruct((B_pad, out_pad), jnp.float32),
        grid=(n_tiles,),
        in_specs=in_specs,
        out_specs=out_spec,
        compiler_params=pltpu.CompilerParams(
            dimension_semantics=("parallel",),                # 2 TCs on v7x
            vmem_limit_bytes=48 * 1024 * 1024),
    )(x_pad, *packed)

    return out_full[:B, :out_dim]


# ---------------------------------------------------------------------------
# Pure-JAX references
# ---------------------------------------------------------------------------
def position_net_reference(x, params):
    """Exact f32 reference (the PyTorch module's math, omega_0 = 1.0)."""
    (w1, b1, sw1, sb1,
     w2, b2, sw2, sb2,
     w3, b3, sw3, sb3,
     w4, b4, sw4, sb4,
     w5, b5) = params

    def block(h, w, b, sw, sb):
        return jnp.maximum(jnp.sin(h @ w + b) + (h @ sw + sb), 0.0)

    h = block(x, w1, b1, sw1, sb1)
    h = block(h, w2, b2, sw2, sb2)
    h = block(h, w3, b3, sw3, sb3)
    h = block(h, w4, b4, sw4, sb4)
    return h @ w5 + b5


def position_net_reference_bf16(x, params):
    """Same math, but matmul inputs rounded to bf16 with f32 accumulation —
    exactly the precision the kernel feeds the MXU (intentional tradeoff)."""
    (w1, b1, sw1, sb1,
     w2, b2, sw2, sb2,
     w3, b3, sw3, sb3,
     w4, b4, sw4, sb4,
     w5, b5) = params

    def bdot(a, w):
        return jnp.dot(a.astype(jnp.bfloat16), w.astype(jnp.bfloat16),
                       preferred_element_type=jnp.float32)

    # layer 1 (fan_in == 1) is computed in f32 on the VPU inside the kernel
    h = jnp.maximum(jnp.sin(x @ w1 + b1) + (x @ sw1 + sb1), 0.0)
    for (w, b, sw, sb) in ((w2, b2, sw2, sb2),
                           (w3, b3, sw3, sb3),
                           (w4, b4, sw4, sb4)):
        h = jnp.maximum(jnp.sin(bdot(h, w) + b) + (bdot(h, sw) + sb), 0.0)
    return bdot(h, w5) + b5


if __name__ == "__main__":
    num_vorts = 4                  # -> out_dim = 8
    key = jax.random.PRNGKey(0)
    k_x, k_p, k_x2 = jax.random.split(key, 3)
    params = init_params(k_p, num_vorts)

    # small batch (single-tile path)
    x_small = jax.random.uniform(k_x, (8, 1), jnp.float32)
    out_small = jax.block_until_ready(position_net_forward(x_small, params))
    ref_small = position_net_reference_bf16(x_small, params)
    np.testing.assert_allclose(np.asarray(out_small), np.asarray(ref_small),
                               rtol=1e-2, atol=1e-2)

    # batch that exercises adaptive tiling (B=600 -> TB=304, 2 tiles, only 8 pad rows)
    x_big = jax.random.uniform(k_x2, (600, 1), jnp.float32)
    out_big = jax.block_until_ready(position_net_forward(x_big, params))
    ref_big = position_net_reference_bf16(x_big, params)
    np.testing.assert_allclose(np.asarray(out_big), np.asarray(ref_big),
                               rtol=1e-2, atol=1e-2)

    print("KERNEL_OK")
</pallas_src>

<mosaic_0001>
module attributes {stable_mosaic.version = 11 : i64} {
  func.func @position_net_kernel(%arg0: i32, %arg1: memref<8x1xf32, #tpu.memory_space<vmem>>, %arg2: memref<1x128xf32, #tpu.memory_space<vmem>>, %arg3: memref<1x128xf32, #tpu.memory_space<vmem>>, %arg4: memref<64x256xbf16, #tpu.memory_space<vmem>>, %arg5: memref<1x256xf32, #tpu.memory_space<vmem>>, %arg6: memref<128x512xbf16, #tpu.memory_space<vmem>>, %arg7: memref<1x512xf32, #tpu.memory_space<vmem>>, %arg8: memref<256x1024xbf16, #tpu.memory_space<vmem>>, %arg9: memref<1x1024xf32, #tpu.memory_space<vmem>>, %arg10: memref<512x128xbf16, #tpu.memory_space<vmem>>, %arg11: memref<1x128xf32, #tpu.memory_space<vmem>>, %arg12: memref<8x128xf32, #tpu.memory_space<vmem>>) attributes {dimension_semantics = [#tpu.dimension_semantics<parallel>], iteration_bounds = array<i64: 1>, scalar_prefetch = 0 : i64, scratch_operands = 0 : i64, tpu.core_type = #tpu.core_type<tc>, window_params = [{transform_indices = @transform_0, window_bounds = array<i64: 8, 1>}, {pipeline_mode = #tpu.pipeline_mode<synchronous>, transform_indices = @transform_1, window_bounds = array<i64: 1, 128>}, {pipeline_mode = #tpu.pipeline_mode<synchronous>, transform_indices = @transform_2, window_bounds = array<i64: 1, 128>}, {pipeline_mode = #tpu.pipeline_mode<synchronous>, transform_indices = @transform_3, window_bounds = array<i64: 64, 256>}, {pipeline_mode = #tpu.pipeline_mode<synchronous>, transform_indices = @transform_4, window_bounds = array<i64: 1, 256>}, {pipeline_mode = #tpu.pipeline_mode<synchronous>, transform_indices = @transform_5, window_bounds = array<i64: 128, 512>}, {pipeline_mode = #tpu.pipeline_mode<synchronous>, transform_indices = @transform_6, window_bounds = array<i64: 1, 512>}, {pipeline_mode = #tpu.pipeline_mode<synchronous>, transform_indices = @transform_7, window_bounds = array<i64: 256, 1024>}, {pipeline_mode = #tpu.pipeline_mode<synchronous>, transform_indices = @transform_8, window_bounds = array<i64: 1, 1024>}, {pipeline_mode = #tpu.pipeline_mode<synchronous>, transform_indices = @transform_9, window_bounds = array<i64: 512, 128>}, {pipeline_mode = #tpu.pipeline_mode<synchronous>, transform_indices = @transform_10, window_bounds = array<i64: 1, 128>}, {transform_indices = @transform_11, window_bounds = array<i64: 8, 128>}]} {
    %c0 = arith.constant 0 : index
    %c0_0 = arith.constant 0 : index
    %0 = vector.load %arg1[%c0, %c0_0] : memref<8x1xf32, #tpu.memory_space<vmem>>, vector<8x1xf32>
    %c0_1 = arith.constant 0 : index
    %c0_2 = arith.constant 0 : index
    %1 = vector.load %arg2[%c0_1, %c0_2] : memref<1x128xf32, #tpu.memory_space<vmem>>, vector<1x128xf32>
    %2 = vector.broadcast %0 : vector<8x1xf32> to vector<8x128xf32>
    %3 = vector.broadcast %1 : vector<1x128xf32> to vector<8x128xf32>
    %4 = arith.mulf %2, %3 : vector<8x128xf32>
    %c0_3 = arith.constant 0 : index
    %c0_4 = arith.constant 0 : index
    %5 = vector.load %arg3[%c0_3, %c0_4] : memref<1x128xf32, #tpu.memory_space<vmem>>, vector<1x128xf32>
    %6 = vector.broadcast %5 : vector<1x128xf32> to vector<8x128xf32>
    %7 = arith.addf %4, %6 : vector<8x128xf32>
    %8 = vector.extract_strided_slice %7 {offsets = [0, 0], sizes = [8, 64], strides = [1, 1]} : vector<8x128xf32> to vector<8x64xf32>
    %9 = math.sin %8 : vector<8x64xf32>
    %10 = vector.extract_strided_slice %7 {offsets = [0, 64], sizes = [8, 64], strides = [1, 1]} : vector<8x128xf32> to vector<8x64xf32>
    %11 = arith.addf %9, %10 : vector<8x64xf32>
    %cst = arith.constant 0.000000e+00 : f32
    %12 = vector.broadcast %cst : f32 to vector<8x64xf32>
    %13 = arith.maximumf %11, %12 : vector<8x64xf32>
    %14 = arith.truncf %13 : vector<8x64xf32> to vector<8x64xbf16>
    %c0_5 = arith.constant 0 : index
    %c0_6 = arith.constant 0 : index
    %15 = vector.load %arg4[%c0_5, %c0_6] : memref<64x256xbf16, #tpu.memory_space<vmem>>, vector<64x256xbf16>
    %cst_7 = arith.constant dense<0.000000e+00> : vector<8x256xf32>
    %16 = tpu.matmul %14, %15, %cst_7 {dimension_numbers = #tpu.dot_dimension_numbers<[1], [0], [0], [1], [0, 0, 1, 1], [], []>} : vector<8x64xbf16>, vector<64x256xbf16>, vector<8x256xf32> -> vector<8x256xf32>
    %c0_8 = arith.constant 0 : index
    %c0_9 = arith.constant 0 : index
    %17 = vector.load %arg5[%c0_8, %c0_9] : memref<1x256xf32, #tpu.memory_space<vmem>>, vector<1x256xf32>
    %18 = vector.broadcast %17 : vector<1x256xf32> to vector<8x256xf32>
    %19 = arith.addf %16, %18 : vector<8x256xf32>
    %20 = vector.extract_strided_slice %19 {offsets = [0, 0], sizes = [8, 128], strides = [1, 1]} : vector<8x256xf32> to vector<8x128xf32>
    %21 = math.sin %20 : vector<8x128xf32>
    %22 = vector.extract_strided_slice %19 {offsets = [0, 128], sizes = [8, 128], strides = [1, 1]} : vector<8x256xf32> to vector<8x128xf32>
    %23 = arith.addf %21, %22 : vector<8x128xf32>
    %cst_10 = arith.constant 0.000000e+00 : f32
    %24 = vector.broadcast %cst_10 : f32 to vector<8x128xf32>
    %25 = arith.maximumf %23, %24 : vector<8x128xf32>
    %26 = arith.truncf %25 : vector<8x128xf32> to vector<8x128xbf16>
    %c0_11 = arith.constant 0 : index
    %c0_12 = arith.constant 0 : index
    %27 = vector.load %arg6[%c0_11, %c0_12] : memref<128x512xbf16, #tpu.memory_space<vmem>>, vector<128x512xbf16>
    %cst_13 = arith.constant dense<0.000000e+00> : vector<8x512xf32>
    %28 = tpu.matmul %26, %27, %cst_13 {dimension_numbers = #tpu.dot_dimension_numbers<[1], [0], [0], [1], [0, 0, 1, 1], [], []>} : vector<8x128xbf16>, vector<128x512xbf16>, vector<8x512xf32> -> vector<8x512xf32>
    %c0_14 = arith.constant 0 : index
    %c0_15 = arith.constant 0 : index
    %29 = vector.load %arg7[%c0_14, %c0_15] : memref<1x512xf32, #tpu.memory_space<vmem>>, vector<1x512xf32>
    %30 = vector.broadcast %29 : vector<1x512xf32> to vector<8x512xf32>
    %31 = arith.addf %28, %30 : vector<8x512xf32>
    %32 = vector.extract_strided_slice %31 {offsets = [0, 0], sizes = [8, 256], strides = [1, 1]} : vector<8x512xf32> to vector<8x256xf32>
    %33 = math.sin %32 : vector<8x256xf32>
    %34 = vector.extract_strided_slice %31 {offsets = [0, 256], sizes = [8, 256], strides = [1, 1]} : vector<8x512xf32> to vector<8x256xf32>
    %35 = arith.addf %33, %34 : vector<8x256xf32>
    %cst_16 = arith.constant 0.000000e+00 : f32
    %36 = vector.broadcast %cst_16 : f32 to vector<8x256xf32>
    %37 = arith.maximumf %35, %36 : vector<8x256xf32>
    %38 = arith.truncf %37 : vector<8x256xf32> to vector<8x256xbf16>
    %c0_17 = arith.constant 0 : index
    %c0_18 = arith.constant 0 : index
    %39 = vector.load %arg8[%c0_17, %c0_18] : memref<256x1024xbf16, #tpu.memory_space<vmem>>, vector<256x1024xbf16>
    %cst_19 = arith.constant dense<0.000000e+00> : vector<8x1024xf32>
    %40 = tpu.matmul %38, %39, %cst_19 {dimension_numbers = #tpu.dot_dimension_numbers<[1], [0], [0], [1], [0, 0, 1, 1], [], []>} : vector<8x256xbf16>, vector<256x1024xbf16>, vector<8x1024xf32> -> vector<8x1024xf32>
    %c0_20 = arith.constant 0 : index
    %c0_21 = arith.constant 0 : index
    %41 = vector.load %arg9[%c0_20, %c0_21] : memref<1x1024xf32, #tpu.memory_space<vmem>>, vector<1x1024xf32>
    %42 = vector.broadcast %41 : vector<1x1024xf32> to vector<8x1024xf32>
    %43 = arith.addf %40, %42 : vector<8x1024xf32>
    %44 = vector.extract_strided_slice %43 {offsets = [0, 0], sizes = [8, 512], strides = [1, 1]} : vector<8x1024xf32> to vector<8x512xf32>
    %45 = math.sin %44 : vector<8x512xf32>
    %46 = vector.extract_strided_slice %43 {offsets = [0, 512], sizes = [8, 512], strides = [1, 1]} : vector<8x1024xf32> to vector<8x512xf32>
    %47 = arith.addf %45, %46 : vector<8x512xf32>
    %cst_22 = arith.constant 0.000000e+00 : f32
    %48 = vector.broadcast %cst_22 : f32 to vector<8x512xf32>
    %49 = arith.maximumf %47, %48 : vector<8x512xf32>
    %50 = arith.truncf %49 : vector<8x512xf32> to vector<8x512xbf16>
    %c0_23 = arith.constant 0 : index
    %c0_24 = arith.constant 0 : index
    %51 = vector.load %arg10[%c0_23, %c0_24] : memref<512x128xbf16, #tpu.memory_space<vmem>>, vector<512x128xbf16>
    %cst_25 = arith.constant dense<0.000000e+00> : vector<8x128xf32>
    %52 = tpu.matmul %50, %51, %cst_25 {dimension_numbers = #tpu.dot_dimension_numbers<[1], [0], [0], [1], [0, 0, 1, 1], [], []>} : vector<8x512xbf16>, vector<512x128xbf16>, vector<8x128xf32> -> vector<8x128xf32>
    %c0_26 = arith.constant 0 : index
    %c0_27 = arith.constant 0 : index
    %53 = vector.load %arg11[%c0_26, %c0_27] : memref<1x128xf32, #tpu.memory_space<vmem>>, vector<1x128xf32>
    %54 = vector.broadcast %53 : vector<1x128xf32> to vector<8x128xf32>
    %55 = arith.addf %52, %54 : vector<8x128xf32>
    %c0_28 = arith.constant 0 : index
    %c0_29 = arith.constant 0 : index
    %56 = vector.load %arg12[%c0_28, %c0_29] : memref<8x128xf32, #tpu.memory_space<vmem>>, vector<8x128xf32>
    tpu.vector_store %arg12[%c0_28, %c0_29], %55 {strides = array<i32>} : memref<8x128xf32, #tpu.memory_space<vmem>>, vector<8x128xf32>,
    return
  }
  func.func @transform_0(%arg0: i32) -> (i32, i32) {
    %c0_i32 = arith.constant 0 : i32
    %c0_i32_0 = arith.constant 0 : i32
    return %arg0, %c0_i32 : i32, i32
  }
  func.func @transform_1(%arg0: i32) -> (i32, i32) {
    %c0_i32 = arith.constant 0 : i32
    %c0_i32_0 = arith.constant 0 : i32
    %c0_i32_1 = arith.constant 0 : i32
    return %c0_i32, %c0_i32_0 : i32, i32
  }
  func.func @transform_2(%arg0: i32) -> (i32, i32) {
    %c0_i32 = arith.constant 0 : i32
    %c0_i32_0 = arith.constant 0 : i32
    %c0_i32_1 = arith.constant 0 : i32
    return %c0_i32, %c0_i32_0 : i32, i32
  }
  func.func @transform_3(%arg0: i32) -> (i32, i32) {
    %c0_i32 = arith.constant 0 : i32
    %c0_i32_0 = arith.constant 0 : i32
    %c0_i32_1 = arith.constant 0 : i32
    return %c0_i32, %c0_i32_0 : i32, i32
  }
  func.func @transform_4(%arg0: i32) -> (i32, i32) {
    %c0_i32 = arith.constant 0 : i32
    %c0_i32_0 = arith.constant 0 : i32
    %c0_i32_1 = arith.constant 0 : i32
    return %c0_i32, %c0_i32_0 : i32, i32
  }
  func.func @transform_5(%arg0: i32) -> (i32, i32) {
    %c0_i32 = arith.constant 0 : i32
    %c0_i32_0 = arith.constant 0 : i32
    %c0_i32_1 = arith.constant 0 : i32
    return %c0_i32, %c0_i32_0 : i32, i32
  }
  func.func @transform_6(%arg0: i32) -> (i32, i32) {
    %c0_i32 = arith.constant 0 : i32
    %c0_i32_0 = arith.constant 0 : i32
    %c0_i32_1 = arith.constant 0 : i32
    return %c0_i32, %c0_i32_0 : i32, i32
  }
  func.func @transform_7(%arg0: i32) -> (i32, i32) {
    %c0_i32 = arith.constant 0 : i32
    %c0_i32_0 = arith.constant 0 : i32
    %c0_i32_1 = arith.constant 0 : i32
    return %c0_i32, %c0_i32_0 : i32, i32
  }
  func.func @transform_8(%arg0: i32) -> (i32, i32) {
    %c0_i32 = arith.constant 0 : i32
    %c0_i32_0 = arith.constant 0 : i32
    %c0_i32_1 = arith.constant 0 : i32
    return %c0_i32, %c0_i32_0 : i32, i32
  }
  func.func @transform_9(%arg0: i32) -> (i32, i32) {
    %c0_i32 = arith.constant 0 : i32
    %c0_i32_0 = arith.constant 0 : i32
    %c0_i32_1 = arith.constant 0 : i32
    return %c0_i32, %c0_i32_0 : i32, i32
  }
  func.func @transform_10(%arg0: i32) -> (i32, i32) {
    %c0_i32 = arith.constant 0 : i32
    %c0_i32_0 = arith.constant 0 : i32
    %c0_i32_1 = arith.constant 0 : i32
    return %c0_i32, %c0_i32_0 : i32, i32
  }
  func.func @transform_11(%arg0: i32) -> (i32, i32) {
    %c0_i32 = arith.constant 0 : i32
    %c0_i32_0 = arith.constant 0 : i32
    return %arg0, %c0_i32 : i32, i32
  }
}

</mosaic_0001>

<llo_original>
// kernel: tpu_custom_call.1
$region0: #{tpu_custom_call.1}
  #allocation0 [shape = 'u32[]', space=smem, size = 0x4, offset = 0x4, fixed_abs, tag = 'smem constant byte address 0x4 - core index']
  #allocation1 [shape = 'u32[72,128]{1,0:T(1,128)}', space=vmem, size = 0x9000, scoped, tag = 'internal scratch']
  %s0 = inlined_call_operand.vmem [shape: f32[8,1], index: 0, kind: input, shape index: {}]
  %s1 = inlined_call_operand.vmem [shape: f32[1,128], index: 1, kind: input, shape index: {}]
  %s2 = inlined_call_operand.hbm [shape: f32[1,128], index: 2, kind: input, shape index: {}]
  %s3 = inlined_call_operand.hbm [shape: bf16[64,256], index: 3, kind: input, shape index: {}]
  %s4 = inlined_call_operand.vmem [shape: f32[1,256], index: 4, kind: input, shape index: {}]
  %s5 = inlined_call_operand.hbm [shape: bf16[128,512], index: 5, kind: input, shape index: {}]
  %s6 = inlined_call_operand.vmem [shape: f32[1,512], index: 6, kind: input, shape index: {}]
  %s7 = inlined_call_operand.hbm [shape: bf16[256,1024], index: 7, kind: input, shape index: {}]
  %s8 = inlined_call_operand.vmem [shape: f32[1,1024], index: 8, kind: input, shape index: {}]
  %s9 = inlined_call_operand.hbm [shape: bf16[512,128], index: 9, kind: input, shape index: {}]
  %s10 = inlined_call_operand.vmem [shape: f32[1,128], index: 10, kind: input, shape index: {}]
  %s11 = inlined_call_operand.hbm [shape: f32[8,128], index: 11, kind: output, shape index: {}]
  %s12 = sld [smem:[#allocation0]]
  $region74: #{tpu_custom_call.1} parent=0
    _
  %s14 = ssub.s32 1, %s12
  %s15 = scalar_select 0, %s14, %s12
  $region1: #{tpu_custom_call.1} parent=0
    #allocation2 [shape = 'u8[512]{0}', space=vmem, size = 0x400, scoped, tag = 'input window, operand 2, single buffered']
    #allocation3 [shape = 's32[1]{0}', space=sflag, size = 0x4, scoped, tag = 'scoped memory for tpu_custom_call.1']
    #allocation4 [shape = 's32[1]{0}', space=sflag, size = 0x4, scoped, tag = 'scoped memory for tpu_custom_call.1']
    #allocation5 [shape = 'u8[32768]{0}', space=vmem, size = 0x8000, scoped, tag = 'input window, operand 3, single buffered']
    #allocation6 [shape = 's32[1]{0}', space=sflag, size = 0x4, scoped, tag = 'scoped memory for tpu_custom_call.1']
    #allocation7 [shape = 'u8[131072]{0}', space=vmem, size = 0x20000, scoped, tag = 'input window, operand 5, single buffered']
    #allocation8 [shape = 'u8[524288]{0}', space=vmem, size = 0x80000, scoped, tag = 'input window, operand 7, single buffered']
    #allocation9 [shape = 's32[1]{0}', space=sflag, size = 0x4, scoped, tag = 'scoped memory for tpu_custom_call.1']
    #allocation10 [shape = 'u8[131072]{0}', space=vmem, size = 0x20000, scoped, tag = 'input window, operand 9, single buffered']
    #allocation11 [shape = 'u8[4096]{0}', space=vmem, size = 0x1000, scoped, tag = 'output window, operand 0, single buffered']
    %16 = vsyncpa [#allocation3], 0
    %17 = vsyncpa [#allocation6], 0
    %18 = vsyncpa [#allocation9], 0
    %19 = vsyncpa [#allocation4], 0
    // Predicated region
    $region2: #{tpu_custom_call.1} parent=1 // pred_check
      _
    $region3: #{tpu_custom_call.1} parent=1 // pred_check_branch
      %21 = sbr.rel (0) target = $region5
    $region4: #{tpu_custom_call.1} parent=1 // pred_region
      _
    $region5: #{tpu_custom_call.1} parent=1 // pred_fallthru
      _
    // Predicated region
    $region6: #{tpu_custom_call.1} parent=1 // pred_check
      _
    $region7: #{tpu_custom_call.1} parent=1 // pred_check_branch
      %23 = sbr.rel (0) target = $region9
    $region8: #{tpu_custom_call.1} parent=1 // pred_region
      _
    $region9: #{tpu_custom_call.1} parent=1 // pred_fallthru
      _
    // Predicated region
    $region10: #{tpu_custom_call.1} parent=1 // pred_check
      _
    $region11: #{tpu_custom_call.1} parent=1 // pred_check_branch
      %25 = sbr.rel (0) target = $region13
    $region12: #{tpu_custom_call.1} parent=1 // pred_region
      %27 = vsyncadd [#allocation3], 0
      %s29 = sshll.u32 %s2, 4
      %s30 = int_to_ptr.hbm [resolvable:$true] %s29
      %s31 = sshll.u32 [#allocation2], 4
      %s32 = int_to_ptr.vmem [resolvable:$true] %s31
      %34 = dma.hbm_to_vmem [thread:$0]  %s30, 16, %s32, [#allocation3]
    $region13: #{tpu_custom_call.1} parent=1 // pred_fallthru
      _
    // Predicated region
    $region14: #{tpu_custom_call.1} parent=1 // pred_check
      _
    $region15: #{tpu_custom_call.1} parent=1 // pred_check_branch
      %36 = sbr.rel (0) target = $region17
    $region16: #{tpu_custom_call.1} parent=1 // pred_region
      %38 = vsyncadd [#allocation6], 0
      %s39 = sshll.u32 %s3, 4
      %s40 = int_to_ptr.hbm [resolvable:$true] %s39
      %s41 = sshll.u32 [#allocation5], 4
      %s42 = int_to_ptr.vmem [resolvable:$true] %s41
      %47 = dma.hbm_to_vmem [thread:$0]  %s40, 1024, %s42, [#allocation6], 128, 128, 8
    $region17: #{tpu_custom_call.1} parent=1 // pred_fallthru
      _
    // Predicated region
    $region18: #{tpu_custom_call.1} parent=1 // pred_check
      _
    $region19: #{tpu_custom_call.1} parent=1 // pred_check_branch
      %49 = sbr.rel (0) target = $region21
    $region20: #{tpu_custom_call.1} parent=1 // pred_region
      _
    $region21: #{tpu_custom_call.1} parent=1 // pred_fallthru
      _
    // Predicated region
    $region22: #{tpu_custom_call.1} parent=1 // pred_check
      _
    $region23: #{tpu_custom_call.1} parent=1 // pred_check_branch
      %51 = sbr.rel (0) target = $region25
    $region24: #{tpu_custom_call.1} parent=1 // pred_region
      %53 = vsyncadd [#allocation6], 0
      %s54 = sshll.u32 %s5, 4
      %s55 = int_to_ptr.hbm [resolvable:$true] %s54
      %s56 = sshll.u32 [#allocation7], 4
      %s57 = int_to_ptr.vmem [resolvable:$true] %s56
      %62 = dma.hbm_to_vmem [thread:$0]  %s55, 4096, %s57, [#allocation6], 256, 256, 16
    $region25: #{tpu_custom_call.1} parent=1 // pred_fallthru
      _
    // Predicated region
    $region26: #{tpu_custom_call.1} parent=1 // pred_check
      _
    $region27: #{tpu_custom_call.1} parent=1 // pred_check_branch
      %64 = sbr.rel (0) target = $region29
    $region28: #{tpu_custom_call.1} parent=1 // pred_region
      _
    $region29: #{tpu_custom_call.1} parent=1 // pred_fallthru
      _
    // Predicated region
    $region30: #{tpu_custom_call.1} parent=1 // pred_check
      _
    $region31: #{tpu_custom_call.1} parent=1 // pred_check_branch
      %66 = sbr.rel (0) target = $region33
    $region32: #{tpu_custom_call.1} parent=1 // pred_region
      %68 = vsyncadd [#allocation9], 0
      %s69 = sshll.u32 %s7, 4
      %s70 = int_to_ptr.hbm [resolvable:$true] %s69
      %s71 = sshll.u32 [#allocation8], 4
      %s72 = int_to_ptr.vmem [resolvable:$true] %s71
      %77 = dma.hbm_to_vmem [thread:$0]  %s70, 16384, %s72, [#allocation9], 512, 512, 32
    $region33: #{tpu_custom_call.1} parent=1 // pred_fallthru
      _
    // Predicated region
    $region34: #{tpu_custom_call.1} parent=1 // pred_check
      _
    $region35: #{tpu_custom_call.1} parent=1 // pred_check_branch
      %79 = sbr.rel (0) target = $region37
    $region36: #{tpu_custom_call.1} parent=1 // pred_region
      _
    $region37: #{tpu_custom_call.1} parent=1 // pred_fallthru
      _
    // Predicated region
    $region38: #{tpu_custom_call.1} parent=1 // pred_check
      _
    $region39: #{tpu_custom_call.1} parent=1 // pred_check_branch
      %81 = sbr.rel (0) target = $region41
    $region40: #{tpu_custom_call.1} parent=1 // pred_region
      %83 = vsyncadd [#allocation9], 0
      %s84 = sshll.u32 %s9, 4
      %s85 = int_to_ptr.hbm [resolvable:$true] %s84
      %s86 = sshll.u32 [#allocation10], 4
      %s87 = int_to_ptr.vmem [resolvable:$true] %s86
      %92 = dma.hbm_to_vmem [thread:$0]  %s85, 4096, %s87, [#allocation9], 64, 64, 4
    $region41: #{tpu_custom_call.1} parent=1 // pred_fallthru
      _
    // Predicated region
    $region42: #{tpu_custom_call.1} parent=1 // pred_check
      _
    $region43: #{tpu_custom_call.1} parent=1 // pred_check_branch
      %94 = sbr.rel (0) target = $region45
    $region44: #{tpu_custom_call.1} parent=1 // pred_region
      _
    $region45: #{tpu_custom_call.1} parent=1 // pred_fallthru
      _
    // Predicated region
    $region46: #{tpu_custom_call.1} parent=1 // pred_check
      _
    $region47: #{tpu_custom_call.1} parent=1 // pred_check_branch
      %96 = sbr.rel (0) target = $region49
    $region48: #{tpu_custom_call.1} parent=1 // pred_region
      %98 = dma.done [#allocation3], 16
    $region49: #{tpu_custom_call.1} parent=1 // pred_fallthru
      _
    // Predicated region
    $region50: #{tpu_custom_call.1} parent=1 // pred_check
      _
    $region51: #{tpu_custom_call.1} parent=1 // pred_check_branch
      %100 = sbr.rel (0) target = $region53
    $region52: #{tpu_custom_call.1} parent=1 // pred_region
      %102 = dma.done [#allocation6], 1024
    $region53: #{tpu_custom_call.1} parent=1 // pred_fallthru
      _
    // Predicated region
    $region54: #{tpu_custom_call.1} parent=1 // pred_check
      _
    $region55: #{tpu_custom_call.1} parent=1 // pred_check_branch
      %104 = sbr.rel (0) target = $region57
    $region56: #{tpu_custom_call.1} parent=1 // pred_region
      %106 = dma.done [#allocation6], 4096
    $region57: #{tpu_custom_call.1} parent=1 // pred_fallthru
      _
    // Predicated region
    $region58: #{tpu_custom_call.1} parent=1 // pred_check
      _
    $region59: #{tpu_custom_call.1} parent=1 // pred_check_branch
      %108 = sbr.rel (0) target = $region61
    $region60: #{tpu_custom_call.1} parent=1 // pred_region
      %110 = dma.done [#allocation9], 16384
    $region61: #{tpu_custom_call.1} parent=1 // pred_fallthru
      _
    // Predicated region
    $region62: #{tpu_custom_call.1} parent=1 // pred_check
      _
    $region63: #{tpu_custom_call.1} parent=1 // pred_check_branch
      %112 = sbr.rel (0) target = $region65
    $region64: #{tpu_custom_call.1} parent=1 // pred_region
      %114 = dma.done [#allocation9], 4096
    $region65: #{tpu_custom_call.1} parent=1 // pred_fallthru
      _
    %v116 = vld [vmem:[%s0] sm:$0xff]
    %v117 = vld [vmem:[%s1] sm:$0x1]
    %119 = vset.pattern.permute.xlu0 0
    %120 = vperm.xlu0 %119, %v116
    %v121 = vpop.permute.xlu0 %120
    %v124 = vperm.slane %v117, 0
    %v126 = vmul.f32 %v121, %v124
    %v127 = vld [vmem:[#allocation2] sm:$0x1]
    %v129 = vperm.slane %v127, 0
    %v131 = vadd.f32 %v126, %v129
    %v132 = vand.u32 2147483647, %v131
    %vm133 = vcmp.le.f32.partialorder %v132, 0.7853982
    %vm134 = vcmp.lt.s32.totalorder %v131, 0
    %v135 = vand.u32 %v131, 2139095040
    %v136 = vshrl.u32 %v135, 23
    %v137 = vsub.s32 %v136, 127
    %v138 = vand.u32 2147483647, %v131
    %v139 = vand.u32 %v138, 8388607
    %v140 = vor.u32 %v139, 8388608
    %v141 = vsub.s32 0, %v140
    %v142 = vadd.s32 %v137, 1
    %vm143 = vcmp.gt.s32.totalorder %v142, 0
    %v144 = vsel %vm143, %v142, 0
    %v145 = vshrl.u32 %v144, 5
    %v146 = vand.u32 %v144, 31
    %v147 = vsub.s32 32, %v146
    %v148 = vshrl.u32 683565275, %v147
    %v149 = vshll.u32 683565275, %v146
    %v150 = vshrl.u32 2475754826, %v147
    %v151 = vor.u32 %v149, %v150
    %v152 = vshll.u32 2475754826, %v146
    %v153 = vshrl.u32 2131351028, %v147
    %v154 = vor.u32 %v152, %v153
    %v155 = vshll.u32 2131351028, %v146
    %v156 = vshrl.u32 2102212464, %v147
    %v157 = vor.u32 %v155, %v156
    %v158 = vshll.u32 2102212464, %v146
    %v159 = vshrl.u32 920167782, %v147
    %v160 = vor.u32 %v158, %v159
    %v161 = vshll.u32 920167782, %v146
    %v162 = vshrl.u32 1326507024, %v147
    %v163 = vor.u32 %v161, %v162
    %vm164 = vcmp.lt.s32.totalorder %v145, 1
    %vm165 = vcmp.lt.s32.totalorder %v145, 2
    %vm166 = vcmp.lt.s32.totalorder %v145, 3
    %vm167 = vcmp.lt.s32.totalorder %v145, 4
    %v168 = vsel %vm164, %v148, %v151
    %v169 = vsel %vm167, %v157, 2102212464
    %v170 = vsel %vm166, %v154, %v169
    %v171 = vsel %vm165, %v168, %v170
    %v172 = vsel %vm164, %v151, %v154
    %v173 = vsel %vm167, %v160, 920167782
    %v174 = vsel %vm166, %v157, %v173
    %v175 = vsel %vm165, %v172, %v174
    %v176 = vsel %vm164, %v154, %v157
    %v177 = vsel %vm167, %v163, 1326507024
    %v178 = vsel %vm166, %v160, %v177
    %v179 = vsel %vm165, %v176, %v178
    %v180 = vshll.u32 %v140, 8
    %v181 = vand.u32 %v180, 65535
    %v182 = vshrl.u32 %v180, 16
    %v183 = vand.u32 %v179, 65535
    %v184 = vshrl.u32 %v179, 16
    %v185 = vmul.u32 %v181, %v183
    %v186 = vmul.u32 %v181, %v184
    %v187 = vmul.u32 %v182, %v183
    %v188 = vmul.u32 %v182, %v184
    %v189 = vshll.u32 %v186, 16
    %v190 = vshrl.u32 %v186, 16
    %v191 = vshll.u32 %v187, 16
    %v192 = vshrl.u32 %v187, 16
    %vm193 = vc.u32 %v185, %v189
    %v194 = vsel %vm193, 1, 0
    %v195 = vadd.s32 %v185, %v189
    %v196 = vadd.s32 %v188, %v194
    %vm197 = vc.u32 %v195, %v191
    %v198 = vsel %vm197, 1, 0
    %v199 = vadd.s32 %v195, %v191
    %v200 = vadd.s32 %v196, %v198
    %v201 = vadd.s32 %v200, %v190
    %v202 = vadd.s32 %v201, %v192
    %v203 = vand.u32 %v180, 65535
    %v204 = vshrl.u32 %v180, 16
    %v205 = vand.u32 %v175, 65535
    %v206 = vshrl.u32 %v175, 16
    %v207 = vmul.u32 %v203, %v205
    %v208 = vmul.u32 %v203, %v206
    %v209 = vmul.u32 %v204, %v205
    %v210 = vmul.u32 %v204, %v206
    %v211 = vshll.u32 %v208, 16
    %v212 = vshrl.u32 %v208, 16
    %v213 = vshll.u32 %v209, 16
    %v214 = vshrl.u32 %v209, 16
    %vm215 = vc.u32 %v207, %v211
    %v216 = vsel %vm215, 1, 0
    %v217 = vadd.s32 %v207, %v211
    %v218 = vadd.s32 %v210, %v216
    %vm219 = vc.u32 %v217, %v213
    %v220 = vsel %vm219, 1, 0
    %v221 = vadd.s32 %v217, %v213
    %v222 = vadd.s32 %v218, %v220
    %v223 = vadd.s32 %v222, %v212
    %v224 = vadd.s32 %v223, %v214
    %v225 = vmul.u32 %v180, %v171
    %v226 = vadd.s32 %v202, %v221
    %vm227 = vc.u32 %v202, %v221
    %v228 = vadd.s32 %v224, 1
    %v229 = vsel %vm227, %v228, %v224
    %v230 = vadd.s32 %v225, %v229
    %v231 = vadd.s32 %v230, 536870912
    %v232 = vshrl.u32 %v231, 30
    %v233 = vshll.u32 %v232, 30
    %v234 = vsub.s32 %v230, %v233
    %vm235 = vcmp.lt.s32.totalorder %v234, 0
    %v236 = vsub.s32 0, %v234
    %v237 = vsel %vm235, %v236, %v234
    %v238 = vclz %v237
    %v239 = vsub.s32 %v238, 2
    %vm240 = vcmp.gt.s32.totalorder 0, %v239
    %v241 = vsel %vm240, 0, %v239
    %v242 = vsub.s32 32, %v241
    %v243 = vshll.u32 %v234, %v241
    %v244 = vshrl.u32 %v226, %v242
    %v245 = vor.u32 %v243, %v244
    %v246 = vsub.s32 4294967266, %v241
    %v247 = vadd.s32 %v246, 127
    %v248 = vshll.u32 %v247, 23
    %v249 = vor.u32 4788187, %v248
    %v250 = vand.u32 2147483647, %v249
    %v252 = vcvt.s32.f32 %v245
    %v253 = vmul.f32 %v252, %v250
    %v254 = vxor.u32 %v253, 2147483648
    %v255 = vsel %vm134, %v254, %v253
    %v256 = vsub.s32 4, %v232
    %v257 = vsel %vm134, %v256, %v232
    %v258 = vsel %vm133, %v131, %v255
    %v259 = vsel %vm133, 0, %v257
    %v260 = vmul.f32 %v258, %v258
    %v261 = vmul.f32 %v260, -0.001358992
    %v262 = vadd.f32 %v261, 0.041655596
    %v263 = vmul.f32 %v260, %v262
    %v264 = vadd.f32 %v263, -0.4999988
    %v265 = vmul.f32 %v260, %v264
    %v266 = vadd.f32 1.0, %v265
    %v267 = vmul.f32 %v258, %v258
    %v268 = vmul.f32 %v267, -0.00019511016
    %v269 = vadd.f32 %v268, 0.008332121
    %v270 = vmul.f32 %v267, %v269
    %v271 = vadd.f32 %v270, -0.16666654
    %v272 = vmul.f32 %v267, %v271
    %v273 = vadd.f32 %v272, 1.0
    %v274 = vmul.f32 %v273, %v258
    %vm275 = vweird.f32 %v131
    %v276 = vadd.s32 %v259, 3
    %v277 = vand.u32 %v276, 3
    %vm278 = vcmp.lt.s32.totalorder %v277, 2
    %vm279 = vcmp.eq.s32.totalorder %v277, 0
    %v280 = vxor.u32 %v274, 2147483648
    %v281 = vsel %vm279, %v266, %v280
    %vm282 = vcmp.eq.s32.totalorder %v277, 2
    %v283 = vxor.u32 %v266, 2147483648
    %v284 = vsel %vm282, %v283, %v274
    %v285 = vsel %vm278, %v281, %v284
    %v286 = vsel %vm275, nan, %v285
    %288 = vrot.lane.b32.xlu0 %v131, 64
    %v289 = vpop.permute.xlu0 %288
    %v291 = vadd.f32 %v286, %v289
    %v292 = vmax.f32 %v291, 0.0
    %v293 = vpack.c.bf16 %v292, %v292
    %v294 = vld [vmem:[#allocation5] sm:$0xff]
    %v295 = vld [vmem:[#allocation5 + $0x8] sm:$0xff]
    %v296 = vld [vmem:[#allocation5 + $0x10] sm:$0xff]
    %v297 = vld [vmem:[#allocation5 + $0x18] sm:$0xff]
    %v298 = vld [vmem:[#allocation5 + $0x20] sm:$0xff]
    %v299 = vld [vmem:[#allocation5 + $0x28] sm:$0xff]
    %v300 = vld [vmem:[#allocation5 + $0x30] sm:$0xff]
    %v301 = vld [vmem:[#allocation5 + $0x38] sm:$0xff]
    %v302 = vld [vmem:[%s4] sm:$0x3]
    %v304 = vperm.slane %v302, 0
    %v305 = vperm.slane %v302, 1
    %v316 = vunpack.c.l.b16 %v294
    %v317 = vunpack.c.h.b16 %v294
    %v318 = vunpack.c.l.b16 %v295
    %v319 = vunpack.c.h.b16 %v295
    %v320 = vunpack.c.l.b16 %v296
    %v321 = vunpack.c.h.b16 %v296
    %v322 = vunpack.c.l.b16 %v297
    %v323 = vunpack.c.h.b16 %v297
    %v324 = vunpack.c.l.b16 %v298
    %v325 = vunpack.c.h.b16 %v298
    %v326 = vunpack.c.l.b16 %v299
    %v327 = vunpack.c.h.b16 %v299
    %v328 = vunpack.c.l.b16 %v300
    %v329 = vunpack.c.h.b16 %v300
    %v330 = vunpack.c.l.b16 %v301
    %v331 = vunpack.c.h.b16 %v301
    %v332 = vpack.c.b16 %v318, %v316
    %v333 = vpack.c.b16 %v319, %v317
    %v334 = vpack.c.b16 %v322, %v320
    %v335 = vpack.c.b16 %v323, %v321
    %v336 = vpack.c.b16 %v326, %v324
    %v337 = vpack.c.b16 %v327, %v325
    %v338 = vpack.c.b16 %v330, %v328
    %v339 = vpack.c.b16 %v331, %v329
    %vm348 = vcmask 523264
    %v350 = vsel %vm348, %v293, 0
    %352 = vmatpush.bf16.msra.mxu0 0
    %353 = vmatpush.bf16.msra.mxu0 0
    %354 = vmatpush.bf16.msra.mxu0 0
    %355 = vmatpush.bf16.msra.mxu0 0
    %356 = vmatpush.bf16.msra.mxu0 %v338
    %357 = vmatpush.bf16.msra.mxu0 %v336
    %358 = vmatpush.bf16.msra.mxu0 %v334
    %359 = vmatpush.bf16.msra.mxu0 %v332
    %360 = vmatmul.bf16.gmra.mxu0 %v350
    %v361 = vpop.f32.mrf.mxu0
    %v362 = vadd.f32 %v304, %v361
    %v363 = vpop.f32.mrf.mxu0
    %364 = vdwg.mxu0
    %365 = vmatpush.bf16.msra.mxu0 0
    %366 = vmatpush.bf16.msra.mxu0 0
    %367 = vmatpush.bf16.msra.mxu0 0
    %368 = vmatpush.bf16.msra.mxu0 0
    %369 = vmatpush.bf16.msra.mxu0 %v339
    %370 = vmatpush.bf16.msra.mxu0 %v337
    %371 = vmatpush.bf16.msra.mxu0 %v335
    %372 = vmatpush.bf16.msra.mxu0 %v333
    %373 = vmatmul.bf16.gmra.mxu0 %v350
    %v374 = vpop.f32.mrf.mxu0
    %v375 = vadd.f32 %v305, %v374
    %v376 = vpop.f32.mrf.mxu0
    %377 = vdwg.mxu0
    %v378 = vand.u32 2147483647, %v362
    %vm379 = vcmp.le.f32.partialorder %v378, 0.7853982
    %vm380 = vcmp.lt.s32.totalorder %v362, 0
    %v381 = vand.u32 %v362, 2139095040
    %v382 = vshrl.u32 %v381, 23
    %v383 = vsub.s32 %v382, 127
    %v384 = vand.u32 2147483647, %v362
    %v385 = vand.u32 %v384, 8388607
    %v386 = vor.u32 %v385, 8388608
    %v387 = vsub.s32 0, %v386
    %v388 = vadd.s32 %v383, 1
    %vm389 = vcmp.gt.s32.totalorder %v388, 0
    %v390 = vsel %vm389, %v388, 0
    %v391 = vshrl.u32 %v390, 5
    %v392 = vand.u32 %v390, 31
    %v393 = vsub.s32 32, %v392
    %v394 = vshrl.u32 683565275, %v393
    %v395 = vshll.u32 683565275, %v392
    %v396 = vshrl.u32 2475754826, %v393
    %v397 = vor.u32 %v395, %v396
    %v398 = vshll.u32 2475754826, %v392
    %v399 = vshrl.u32 2131351028, %v393
    %v400 = vor.u32 %v398, %v399
    %v401 = vshll.u32 2131351028, %v392
    %v402 = vshrl.u32 2102212464, %v393
    %v403 = vor.u32 %v401, %v402
    %v404 = vshll.u32 2102212464, %v392
    %v405 = vshrl.u32 920167782, %v393
    %v406 = vor.u32 %v404, %v405
    %v407 = vshll.u32 920167782, %v392
    %v408 = vshrl.u32 1326507024, %v393
    %v409 = vor.u32 %v407, %v408
    %vm410 = vcmp.lt.s32.totalorder %v391, 1
    %vm411 = vcmp.lt.s32.totalorder %v391, 2
    %vm412 = vcmp.lt.s32.totalorder %v391, 3
    %vm413 = vcmp.lt.s32.totalorder %v391, 4
    %v414 = vsel %vm410, %v394, %v397
    %v415 = vsel %vm413, %v403, 2102212464
    %v416 = vsel %vm412, %v400, %v415
    %v417 = vsel %vm411, %v414, %v416
    %v418 = vsel %vm410, %v397, %v400
    %v419 = vsel %vm413, %v406, 920167782
    %v420 = vsel %vm412, %v403, %v419
    %v421 = vsel %vm411, %v418, %v420
    %v422 = vsel %vm410, %v400, %v403
    %v423 = vsel %vm413, %v409, 1326507024
    %v424 = vsel %vm412, %v406, %v423
    %v425 = vsel %vm411, %v422, %v424
    %v426 = vshll.u32 %v386, 8
    %v427 = vand.u32 %v426, 65535
    %v428 = vshrl.u32 %v426, 16
    %v429 = vand.u32 %v425, 65535
    %v430 = vshrl.u32 %v425, 16
    %v431 = vmul.u32 %v427, %v429
    %v432 = vmul.u32 %v427, %v430
    %v433 = vmul.u32 %v428, %v429
    %v434 = vmul.u32 %v428, %v430
    %v435 = vshll.u32 %v432, 16
    %v436 = vshrl.u32 %v432, 16
    %v437 = vshll.u32 %v433, 16
    %v438 = vshrl.u32 %v433, 16
    %vm439 = vc.u32 %v431, %v435
    %v440 = vsel %vm439, 1, 0
    %v441 = vadd.s32 %v431, %v435
    %v442 = vadd.s32 %v434, %v440
    %vm443 = vc.u32 %v441, %v437
    %v444 = vsel %vm443, 1, 0
    %v445 = vadd.s32 %v441, %v437
    %v446 = vadd.s32 %v442, %v444
    %v447 = vadd.s32 %v446, %v436
    %v448 = vadd.s32 %v447, %v438
    %v449 = vand.u32 %v426, 65535
    %v450 = vshrl.u32 %v426, 16
    %v451 = vand.u32 %v421, 65535
    %v452 = vshrl.u32 %v421, 16
    %v453 = vmul.u32 %v449, %v451
    %v454 = vmul.u32 %v449, %v452
    %v455 = vmul.u32 %v450, %v451
    %v456 = vmul.u32 %v450, %v452
    %v457 = vshll.u32 %v454, 16
    %v458 = vshrl.u32 %v454, 16
    %v459 = vshll.u32 %v455, 16
    %v460 = vshrl.u32 %v455, 16
    %vm461 = vc.u32 %v453, %v457
    %v462 = vsel %vm461, 1, 0
    %v463 = vadd.s32 %v453, %v457
    %v464 = vadd.s32 %v456, %v462
    %vm465 = vc.u32 %v463, %v459
    %v466 = vsel %vm465, 1, 0
    %v467 = vadd.s32 %v463, %v459
    %v468 = vadd.s32 %v464, %v466
    %v469 = vadd.s32 %v468, %v458
    %v470 = vadd.s32 %v469, %v460
    %v471 = vmul.u32 %v426, %v417
    %v472 = vadd.s32 %v448, %v467
    %vm473 = vc.u32 %v448, %v467
    %v474 = vadd.s32 %v470, 1
    %v475 = vsel %vm473, %v474, %v470
    %v476 = vadd.s32 %v471, %v475
    %v477 = vadd.s32 %v476, 536870912
    %v478 = vshrl.u32 %v477, 30
    %v479 = vshll.u32 %v478, 30
    %v480 = vsub.s32 %v476, %v479
    %vm481 = vcmp.lt.s32.totalorder %v480, 0
    %v482 = vsub.s32 0, %v480
    %v483 = vsel %vm481, %v482, %v480
    %v484 = vclz %v483
    %v485 = vsub.s32 %v484, 2
    %vm486 = vcmp.gt.s32.totalorder 0, %v485
    %v487 = vsel %vm486, 0, %v485
    %v488 = vsub.s32 32, %v487
    %v489 = vshll.u32 %v480, %v487
    %v490 = vshrl.u32 %v472, %v488
    %v491 = vor.u32 %v489, %v490
    %v492 = vsub.s32 4294967266, %v487
    %v493 = vadd.s32 %v492, 127
    %v494 = vshll.u32 %v493, 23
    %v495 = vor.u32 4788187, %v494
    %v496 = vand.u32 2147483647, %v495
    %v498 = vcvt.s32.f32 %v491
    %v499 = vmul.f32 %v498, %v496
    %v500 = vxor.u32 %v499, 2147483648
    %v501 = vsel %vm380, %v500, %v499
    %v502 = vsub.s32 4, %v478
    %v503 = vsel %vm380, %v502, %v478
    %v504 = vsel %vm379, %v362, %v501
    %v505 = vsel %vm379, 0, %v503
    %v506 = vmul.f32 %v504, %v504
    %v507 = vmul.f32 %v506, -0.001358992
    %v508 = vadd.f32 %v507, 0.041655596
    %v509 = vmul.f32 %v506, %v508
    %v510 = vadd.f32 %v509, -0.4999988
    %v511 = vmul.f32 %v506, %v510
    %v512 = vadd.f32 1.0, %v511
    %v513 = vmul.f32 %v504, %v504
    %v514 = vmul.f32 %v513, -0.00019511016
    %v515 = vadd.f32 %v514, 0.008332121
    %v516 = vmul.f32 %v513, %v515
    %v517 = vadd.f32 %v516, -0.16666654
    %v518 = vmul.f32 %v513, %v517
    %v519 = vadd.f32 %v518, 1.0
    %v520 = vmul.f32 %v519, %v504
    %vm521 = vweird.f32 %v362
    %v522 = vadd.s32 %v505, 3
    %v523 = vand.u32 %v522, 3
    %vm524 = vcmp.lt.s32.totalorder %v523, 2
    %vm525 = vcmp.eq.s32.totalorder %v523, 0
    %v526 = vxor.u32 %v520, 2147483648
    %v527 = vsel %vm525, %v512, %v526
    %vm528 = vcmp.eq.s32.totalorder %v523, 2
    %v529 = vxor.u32 %v512, 2147483648
    %v530 = vsel %vm528, %v529, %v520
    %v531 = vsel %vm524, %v527, %v530
    %v532 = vsel %vm521, nan, %v531
    %v533 = vadd.f32 %v532, %v375
    %v534 = vmax.f32 %v533, 0.0
    %v535 = vpack.c.bf16 %v534, %v534
    %v536 = vld [vmem:[#allocation7] sm:$0xff]
    %v537 = vld [vmem:[#allocation7 + $0x8] sm:$0xff]
    %v538 = vld [vmem:[#allocation7 + $0x10] sm:$0xff]
    %v539 = vld [vmem:[#allocation7 + $0x18] sm:$0xff]
    %v540 = vld [vmem:[#allocation7 + $0x20] sm:$0xff]
    %v541 = vld [vmem:[#allocation7 + $0x28] sm:$0xff]
    %v542 = vld [vmem:[#allocation7 + $0x30] sm:$0xff]
    %v543 = vld [vmem:[#allocation7 + $0x38] sm:$0xff]
    %v544 = vld [vmem:[#allocation7 + $0x40] sm:$0xff]
    %v545 = vld [vmem:[#allocation7 + $0x48] sm:$0xff]
    %v546 = vld [vmem:[#allocation7 + $0x50] sm:$0xff]
    %v547 = vld [vmem:[#allocation7 + $0x58] sm:$0xff]
    %v548 = vld [vmem:[#allocation7 + $0x60] sm:$0xff]
    %v549 = vld [vmem:[#allocation7 + $0x68] sm:$0xff]
    %v550 = vld [vmem:[#allocation7 + $0x70] sm:$0xff]
    %v551 = vld [vmem:[#allocation7 + $0x78] sm:$0xff]
    %v552 = vld [vmem:[#allocation7 + $0x80] sm:$0xff]
    %v553 = vld [vmem:[#allocation7 + $0x88] sm:$0xff]
    %v554 = vld [vmem:[#allocation7 + $0x90] sm:$0xff]
    %v555 = vld [vmem:[#allocation7 + $0x98] sm:$0xff]
    %v556 = vld [vmem:[#allocation7 + $0xa0] sm:$0xff]
    %v557 = vld [vmem:[#allocation7 + $0xa8] sm:$0xff]
    %v558 = vld [vmem:[#allocation7 + $0xb0] sm:$0xff]
    %v559 = vld [vmem:[#allocation7 + $0xb8] sm:$0xff]
    %v560 = vld [vmem:[#allocation7 + $0xc0] sm:$0xff]
    %v561 = vld [vmem:[#allocation7 + $0xc8] sm:$0xff]
    %v562 = vld [vmem:[#allocation7 + $0xd0] sm:$0xff]
    %v563 = vld [vmem:[#allocation7 + $0xd8] sm:$0xff]
    %v564 = vld [vmem:[#allocation7 + $0xe0] sm:$0xff]
    %v565 = vld [vmem:[#allocation7 + $0xe8] sm:$0xff]
    %v566 = vld [vmem:[#allocation7 + $0xf0] sm:$0xff]
    %v567 = vld [vmem:[#allocation7 + $0xf8] sm:$0xff]
    %v568 = vld [vmem:[%s6] sm:$0xf]
    %v570 = vperm.slane %v568, 0
    %v571 = vperm.slane %v568, 1
    %v572 = vperm.slane %v568, 2
    %v573 = vperm.slane %v568, 3
    %v610 = vunpack.c.l.b16 %v536
    %v611 = vunpack.c.h.b16 %v536
    %v612 = vunpack.c.l.b16 %v537
    %v613 = vunpack.c.h.b16 %v537
    %v614 = vunpack.c.l.b16 %v538
    %v615 = vunpack.c.h.b16 %v538
    %v616 = vunpack.c.l.b16 %v539
    %v617 = vunpack.c.h.b16 %v539
    %v618 = vunpack.c.l.b16 %v540
    %v619 = vunpack.c.h.b16 %v540
    %v620 = vunpack.c.l.b16 %v541
    %v621 = vunpack.c.h.b16 %v541
    %v622 = vunpack.c.l.b16 %v542
    %v623 = vunpack.c.h.b16 %v542
    %v624 = vunpack.c.l.b16 %v543
    %v625 = vunpack.c.h.b16 %v543
    %v626 = vunpack.c.l.b16 %v544
    %v627 = vunpack.c.h.b16 %v544
    %v628 = vunpack.c.l.b16 %v545
    %v629 = vunpack.c.h.b16 %v545
    %v630 = vunpack.c.l.b16 %v546
    %v631 = vunpack.c.h.b16 %v546
    %v632 = vunpack.c.l.b16 %v547
    %v633 = vunpack.c.h.b16 %v547
    %v634 = vunpack.c.l.b16 %v548
    %v635 = vunpack.c.h.b16 %v548
    %v636 = vunpack.c.l.b16 %v549
    %v637 = vunpack.c.h.b16 %v549
    %v638 = vunpack.c.l.b16 %v550
    %v639 = vunpack.c.h.b16 %v550
    %v640 = vunpack.c.l.b16 %v551
    %v641 = vunpack.c.h.b16 %v551
    %v642 = vunpack.c.l.b16 %v552
    %v643 = vunpack.c.h.b16 %v552
    %v644 = vunpack.c.l.b16 %v553
    %v645 = vunpack.c.h.b16 %v553
    %v646 = vunpack.c.l.b16 %v554
    %v647 = vunpack.c.h.b16 %v554
    %v648 = vunpack.c.l.b16 %v555
    %v649 = vunpack.c.h.b16 %v555
    %v650 = vunpack.c.l.b16 %v556
    %v651 = vunpack.c.h.b16 %v556
    %v652 = vunpack.c.l.b16 %v557
    %v653 = vunpack.c.h.b16 %v557
    %v654 = vunpack.c.l.b16 %v558
    %v655 = vunpack.c.h.b16 %v558
    %v656 = vunpack.c.l.b16 %v559
    %v657 = vunpack.c.h.b16 %v559
    %v658 = vunpack.c.l.b16 %v560
    %v659 = vunpack.c.h.b16 %v560
    %v660 = vunpack.c.l.b16 %v561
    %v661 = vunpack.c.h.b16 %v561
    %v662 = vunpack.c.l.b16 %v562
    %v663 = vunpack.c.h.b16 %v562
    %v664 = vunpack.c.l.b16 %v563
    %v665 = vunpack.c.h.b16 %v563
    %v666 = vunpack.c.l.b16 %v564
    %v667 = vunpack.c.h.b16 %v564
    %v668 = vunpack.c.l.b16 %v565
    %v669 = vunpack.c.h.b16 %v565
    %v670 = vunpack.c.l.b16 %v566
    %v671 = vunpack.c.h.b16 %v566
    %v672 = vunpack.c.l.b16 %v567
    %v673 = vunpack.c.h.b16 %v567
    %v674 = vpack.c.b16 %v614, %v610
    %v675 = vpack.c.b16 %v615, %v611
    %v676 = vpack.c.b16 %v616, %v612
    %v677 = vpack.c.b16 %v617, %v613
    %v678 = vpack.c.b16 %v622, %v618
    %v679 = vpack.c.b16 %v623, %v619
    %v680 = vpack.c.b16 %v624, %v620
    %v681 = vpack.c.b16 %v625, %v621
    %v682 = vpack.c.b16 %v630, %v626
    %v683 = vpack.c.b16 %v631, %v627
    %v684 = vpack.c.b16 %v632, %v628
    %v685 = vpack.c.b16 %v633, %v629
    %v686 = vpack.c.b16 %v638, %v634
    %v687 = vpack.c.b16 %v639, %v635
    %v688 = vpack.c.b16 %v640, %v636
    %v689 = vpack.c.b16 %v641, %v637
    %v690 = vpack.c.b16 %v646, %v642
    %v691 = vpack.c.b16 %v647, %v643
    %v692 = vpack.c.b16 %v648, %v644
    %v693 = vpack.c.b16 %v649, %v645
    %v694 = vpack.c.b16 %v654, %v650
    %v695 = vpack.c.b16 %v655, %v651
    %v696 = vpack.c.b16 %v656, %v652
    %v697 = vpack.c.b16 %v657, %v653
    %v698 = vpack.c.b16 %v662, %v658
    %v699 = vpack.c.b16 %v663, %v659
    %v700 = vpack.c.b16 %v664, %v660
    %v701 = vpack.c.b16 %v665, %v661
    %v702 = vpack.c.b16 %v670, %v666
    %v703 = vpack.c.b16 %v671, %v667
    %v704 = vpack.c.b16 %v672, %v668
    %v705 = vpack.c.b16 %v673, %v669
    %738 = vmatpush.bf16.msra.mxu0 %v702
    %739 = vmatpush.bf16.msra.mxu0 %v698
    %740 = vmatpush.bf16.msra.mxu0 %v694
    %741 = vmatpush.bf16.msra.mxu0 %v690
    %742 = vmatpush.bf16.msra.mxu0 %v686
    %743 = vmatpush.bf16.msra.mxu0 %v682
    %744 = vmatpush.bf16.msra.mxu0 %v678
    %745 = vmatpush.bf16.msra.mxu0 %v674
    %746 = vmatmul.bf16.gmra.mxu0 %v535
    %v747 = vpop.f32.mrf.mxu0
    %v748 = vadd.f32 %v570, %v747
    %v749 = vpop.f32.mrf.mxu0
    %750 = vdwg.mxu0
    %751 = vmatpush.bf16.msra.mxu0 %v703
    %752 = vmatpush.bf16.msra.mxu0 %v699
    %753 = vmatpush.bf16.msra.mxu0 %v695
    %754 = vmatpush.bf16.msra.mxu0 %v691
    %755 = vmatpush.bf16.msra.mxu0 %v687
    %756 = vmatpush.bf16.msra.mxu0 %v683
    %757 = vmatpush.bf16.msra.mxu0 %v679
    %758 = vmatpush.bf16.msra.mxu0 %v675
    %759 = vmatmul.bf16.gmra.mxu0 %v535
    %v760 = vpop.f32.mrf.mxu0
    %v761 = vadd.f32 %v571, %v760
    %v762 = vpop.f32.mrf.mxu0
    %763 = vdwg.mxu0
    %764 = vmatpush.bf16.msra.mxu0 %v704
    %765 = vmatpush.bf16.msra.mxu0 %v700
    %766 = vmatpush.bf16.msra.mxu0 %v696
    %767 = vmatpush.bf16.msra.mxu0 %v692
    %768 = vmatpush.bf16.msra.mxu0 %v688
    %769 = vmatpush.bf16.msra.mxu0 %v684
    %770 = vmatpush.bf16.msra.mxu0 %v680
    %771 = vmatpush.bf16.msra.mxu0 %v676
    %772 = vmatmul.bf16.gmra.mxu0 %v535
    %v773 = vpop.f32.mrf.mxu0
    %v774 = vadd.f32 %v572, %v773
    %v775 = vpop.f32.mrf.mxu0
    %776 = vdwg.mxu0
    %777 = vmatpush.bf16.msra.mxu0 %v705
    %778 = vmatpush.bf16.msra.mxu0 %v701
    %779 = vmatpush.bf16.msra.mxu0 %v697
    %780 = vmatpush.bf16.msra.mxu0 %v693
    %781 = vmatpush.bf16.msra.mxu0 %v689
    %782 = vmatpush.bf16.msra.mxu0 %v685
    %783 = vmatpush.bf16.msra.mxu0 %v681
    %784 = vmatpush.bf16.msra.mxu0 %v677
    %785 = vmatmul.bf16.gmra.mxu0 %v535
    %v786 = vpop.f32.mrf.mxu0
    %v787 = vadd.f32 %v573, %v786
    %v788 = vpop.f32.mrf.mxu0
    %789 = vdwg.mxu0
    %v790 = vand.u32 2147483647, %v748
    %vm791 = vcmp.le.f32.partialorder %v790, 0.7853982
    %vm792 = vcmp.lt.s32.totalorder %v748, 0
    %v793 = vand.u32 %v748, 2139095040
    %v794 = vshrl.u32 %v793, 23
    %v795 = vsub.s32 %v794, 127
    %v796 = vand.u32 2147483647, %v748
    %v797 = vand.u32 %v796, 8388607
    %v798 = vor.u32 %v797, 8388608
    %v799 = vsub.s32 0, %v798
    %v800 = vadd.s32 %v795, 1
    %vm801 = vcmp.gt.s32.totalorder %v800, 0
    %v802 = vsel %vm801, %v800, 0
    %v803 = vshrl.u32 %v802, 5
    %v804 = vand.u32 %v802, 31
    %v805 = vsub.s32 32, %v804
    %v806 = vshrl.u32 683565275, %v805
    %v807 = vshll.u32 683565275, %v804
    %v808 = vshrl.u32 2475754826, %v805
    %v809 = vor.u32 %v807, %v808
    %v810 = vshll.u32 2475754826, %v804
    %v811 = vshrl.u32 2131351028, %v805
    %v812 = vor.u32 %v810, %v811
    %v813 = vshll.u32 2131351028, %v804
    %v814 = vshrl.u32 2102212464, %v805
    %v815 = vor.u32 %v813, %v814
    %v816 = vshll.u32 2102212464, %v804
    %v817 = vshrl.u32 920167782, %v805
    %v818 = vor.u32 %v816, %v817
    %v819 = vshll.u32 920167782, %v804
    %v820 = vshrl.u32 1326507024, %v805
    %v821 = vor.u32 %v819, %v820
    %vm822 = vcmp.lt.s32.totalorder %v803, 1
    %vm823 = vcmp.lt.s32.totalorder %v803, 2
    %vm824 = vcmp.lt.s32.totalorder %v803, 3
    %vm825 = vcmp.lt.s32.totalorder %v803, 4
    %v826 = vsel %vm822, %v806, %v809
    %v827 = vsel %vm825, %v815, 2102212464
    %v828 = vsel %vm824, %v812, %v827
    %v829 = vsel %vm823, %v826, %v828
    %v830 = vsel %vm822, %v809, %v812
    %v831 = vsel %vm825, %v818, 920167782
    %v832 = vsel %vm824, %v815, %v831
    %v833 = vsel %vm823, %v830, %v832
    %v834 = vsel %vm822, %v812, %v815
    %v835 = vsel %vm825, %v821, 1326507024
    %v836 = vsel %vm824, %v818, %v835
    %v837 = vsel %vm823, %v834, %v836
    %v838 = vshll.u32 %v798, 8
    %v839 = vand.u32 %v838, 65535
    %v840 = vshrl.u32 %v838, 16
    %v841 = vand.u32 %v837, 65535
    %v842 = vshrl.u32 %v837, 16
    %v843 = vmul.u32 %v839, %v841
    %v844 = vmul.u32 %v839, %v842
    %v845 = vmul.u32 %v840, %v841
    %v846 = vmul.u32 %v840, %v842
    %v847 = vshll.u32 %v844, 16
    %v848 = vshrl.u32 %v844, 16
    %v849 = vshll.u32 %v845, 16
    %v850 = vshrl.u32 %v845, 16
    %vm851 = vc.u32 %v843, %v847
    %v852 = vsel %vm851, 1, 0
    %v853 = vadd.s32 %v843, %v847
    %v854 = vadd.s32 %v846, %v852
    %vm855 = vc.u32 %v853, %v849
    %v856 = vsel %vm855, 1, 0
    %v857 = vadd.s32 %v853, %v849
    %v858 = vadd.s32 %v854, %v856
    %v859 = vadd.s32 %v858, %v848
    %v860 = vadd.s32 %v859, %v850
    %v861 = vand.u32 %v838, 65535
    %v862 = vshrl.u32 %v838, 16
    %v863 = vand.u32 %v833, 65535
    %v864 = vshrl.u32 %v833, 16
    %v865 = vmul.u32 %v861, %v863
    %v866 = vmul.u32 %v861, %v864
    %v867 = vmul.u32 %v862, %v863
    %v868 = vmul.u32 %v862, %v864
    %v869 = vshll.u32 %v866, 16
    %v870 = vshrl.u32 %v866, 16
    %v871 = vshll.u32 %v867, 16
    %v872 = vshrl.u32 %v867, 16
    %vm873 = vc.u32 %v865, %v869
    %v874 = vsel %vm873, 1, 0
    %v875 = vadd.s32 %v865, %v869
    %v876 = vadd.s32 %v868, %v874
    %vm877 = vc.u32 %v875, %v871
    %v878 = vsel %vm877, 1, 0
    %v879 = vadd.s32 %v875, %v871
    %v880 = vadd.s32 %v876, %v878
    %v881 = vadd.s32 %v880, %v870
    %v882 = vadd.s32 %v881, %v872
    %v883 = vmul.u32 %v838, %v829
    %v884 = vadd.s32 %v860, %v879
    %vm885 = vc.u32 %v860, %v879
    %v886 = vadd.s32 %v882, 1
    %v887 = vsel %vm885, %v886, %v882
    %v888 = vadd.s32 %v883, %v887
    %v889 = vadd.s32 %v888, 536870912
    %v890 = vshrl.u32 %v889, 30
    %v891 = vshll.u32 %v890, 30
    %v892 = vsub.s32 %v888, %v891
    %vm893 = vcmp.lt.s32.totalorder %v892, 0
    %v894 = vsub.s32 0, %v892
    %v895 = vsel %vm893, %v894, %v892
    %v896 = vclz %v895
    %v897 = vsub.s32 %v896, 2
    %vm898 = vcmp.gt.s32.totalorder 0, %v897
    %v899 = vsel %vm898, 0, %v897
    %v900 = vsub.s32 32, %v899
    %v901 = vshll.u32 %v892, %v899
    %v902 = vshrl.u32 %v884, %v900
    %v903 = vor.u32 %v901, %v902
    %v904 = vsub.s32 4294967266, %v899
    %v905 = vadd.s32 %v904, 127
    %v906 = vshll.u32 %v905, 23
    %v907 = vor.u32 4788187, %v906
    %v908 = vand.u32 2147483647, %v907
    %v910 = vcvt.s32.f32 %v903
    %v911 = vmul.f32 %v910, %v908
    %v912 = vxor.u32 %v911, 2147483648
    %v913 = vsel %vm792, %v912, %v911
    %v914 = vsub.s32 4, %v890
    %v915 = vsel %vm792, %v914, %v890
    %v916 = vsel %vm791, %v748, %v913
    %v917 = vsel %vm791, 0, %v915
    %v918 = vmul.f32 %v916, %v916
    %v919 = vmul.f32 %v918, -0.001358992
    %v920 = vadd.f32 %v919, 0.041655596
    %v921 = vmul.f32 %v918, %v920
    %v922 = vadd.f32 %v921, -0.4999988
    %v923 = vmul.f32 %v918, %v922
    %v924 = vadd.f32 1.0, %v923
    %v925 = vmul.f32 %v916, %v916
    %v926 = vmul.f32 %v925, -0.00019511016
    %v927 = vadd.f32 %v926, 0.008332121
    %v928 = vmul.f32 %v925, %v927
    %v929 = vadd.f32 %v928, -0.16666654
    %v930 = vmul.f32 %v925, %v929
    %v931 = vadd.f32 %v930, 1.0
    %v932 = vmul.f32 %v931, %v916
    %vm933 = vweird.f32 %v748
    %v934 = vadd.s32 %v917, 3
    %v935 = vand.u32 %v934, 3
    %vm936 = vcmp.lt.s32.totalorder %v935, 2
    %vm937 = vcmp.eq.s32.totalorder %v935, 0
    %v938 = vxor.u32 %v932, 2147483648
    %v939 = vsel %vm937, %v924, %v938
    %vm940 = vcmp.eq.s32.totalorder %v935, 2
    %v941 = vxor.u32 %v924, 2147483648
    %v942 = vsel %vm940, %v941, %v932
    %v943 = vsel %vm936, %v939, %v942
    %v944 = vsel %vm933, nan, %v943
    %v945 = vand.u32 2147483647, %v761
    %vm946 = vcmp.le.f32.partialorder %v945, 0.7853982
    %vm947 = vcmp.lt.s32.totalorder %v761, 0
    %v948 = vand.u32 %v761, 2139095040
    %v949 = vshrl.u32 %v948, 23
    %v950 = vsub.s32 %v949, 127
    %v951 = vand.u32 2147483647, %v761
    %v952 = vand.u32 %v951, 8388607
    %v953 = vor.u32 %v952, 8388608
    %v954 = vsub.s32 0, %v953
    %v955 = vadd.s32 %v950, 1
    %vm956 = vcmp.gt.s32.totalorder %v955, 0
    %v957 = vsel %vm956, %v955, 0
    %v958 = vshrl.u32 %v957, 5
    %v959 = vand.u32 %v957, 31
    %v960 = vsub.s32 32, %v959
    %v961 = vshrl.u32 683565275, %v960
    %v962 = vshll.u32 683565275, %v959
    %v963 = vshrl.u32 2475754826, %v960
    %v964 = vor.u32 %v962, %v963
    %v965 = vshll.u32 2475754826, %v959
    %v966 = vshrl.u32 2131351028, %v960
    %v967 = vor.u32 %v965, %v966
    %v968 = vshll.u32 2131351028, %v959
    %v969 = vshrl.u32 2102212464, %v960
    %v970 = vor.u32 %v968, %v969
    %v971 = vshll.u32 2102212464, %v959
    %v972 = vshrl.u32 920167782, %v960
    %v973 = vor.u32 %v971, %v972
    %v974 = vshll.u32 920167782, %v959
    %v975 = vshrl.u32 1326507024, %v960
    %v976 = vor.u32 %v974, %v975
    %vm977 = vcmp.lt.s32.totalorder %v958, 1
    %vm978 = vcmp.lt.s32.totalorder %v958, 2
    %vm979 = vcmp.lt.s32.totalorder %v958, 3
    %vm980 = vcmp.lt.s32.totalorder %v958, 4
    %v981 = vsel %vm977, %v961, %v964
    %v982 = vsel %vm980, %v970, 2102212464
    %v983 = vsel %vm979, %v967, %v982
    %v984 = vsel %vm978, %v981, %v983
    %v985 = vsel %vm977, %v964, %v967
    %v986 = vsel %vm980, %v973, 920167782
    %v987 = vsel %vm979, %v970, %v986
    %v988 = vsel %vm978, %v985, %v987
    %v989 = vsel %vm977, %v967, %v970
    %v990 = vsel %vm980, %v976, 1326507024
    %v991 = vsel %vm979, %v973, %v990
    %v992 = vsel %vm978, %v989, %v991
    %v993 = vshll.u32 %v953, 8
    %v994 = vand.u32 %v993, 65535
    %v995 = vshrl.u32 %v993, 16
    %v996 = vand.u32 %v992, 65535
    %v997 = vshrl.u32 %v992, 16
    %v998 = vmul.u32 %v994, %v996
    %v999 = vmul.u32 %v994, %v997
    %v1000 = vmul.u32 %v995, %v996
    %v1001 = vmul.u32 %v995, %v997
    %v1002 = vshll.u32 %v999, 16
    %v1003 = vshrl.u32 %v999, 16
    %v1004 = vshll.u32 %v1000, 16
    %v1005 = vshrl.u32 %v1000, 16
    %vm1006 = vc.u32 %v998, %v1002
    %v1007 = vsel %vm1006, 1, 0
    %v1008 = vadd.s32 %v998, %v1002
    %v1009 = vadd.s32 %v1001, %v1007
    %vm1010 = vc.u32 %v1008, %v1004
    %v1011 = vsel %vm1010, 1, 0
    %v1012 = vadd.s32 %v1008, %v1004
    %v1013 = vadd.s32 %v1009, %v1011
    %v1014 = vadd.s32 %v1013, %v1003
    %v1015 = vadd.s32 %v1014, %v1005
    %v1016 = vand.u32 %v993, 65535
    %v1017 = vshrl.u32 %v993, 16
    %v1018 = vand.u32 %v988, 65535
    %v1019 = vshrl.u32 %v988, 16
    %v1020 = vmul.u32 %v1016, %v1018
    %v1021 = vmul.u32 %v1016, %v1019
    %v1022 = vmul.u32 %v1017, %v1018
    %v1023 = vmul.u32 %v1017, %v1019
    %v1024 = vshll.u32 %v1021, 16
    %v1025 = vshrl.u32 %v1021, 16
    %v1026 = vshll.u32 %v1022, 16
    %v1027 = vshrl.u32 %v1022, 16
    %vm1028 = vc.u32 %v1020, %v1024
    %v1029 = vsel %vm1028, 1, 0
    %v1030 = vadd.s32 %v1020, %v1024
    %v1031 = vadd.s32 %v1023, %v1029
    %vm1032 = vc.u32 %v1030, %v1026
    %v1033 = vsel %vm1032, 1, 0
    %v1034 = vadd.s32 %v1030, %v1026
    %v1035 = vadd.s32 %v1031, %v1033
    %v1036 = vadd.s32 %v1035, %v1025
    %v1037 = vadd.s32 %v1036, %v1027
    %v1038 = vmul.u32 %v993, %v984
    %v1039 = vadd.s32 %v1015, %v1034
    %vm1040 = vc.u32 %v1015, %v1034
    %v1041 = vadd.s32 %v1037, 1
    %v1042 = vsel %vm1040, %v1041, %v1037
    %v1043 = vadd.s32 %v1038, %v1042
    %v1044 = vadd.s32 %v1043, 536870912
    %v1045 = vshrl.u32 %v1044, 30
    %v1046 = vshll.u32 %v1045, 30
    %v1047 = vsub.s32 %v1043, %v1046
    %vm1048 = vcmp.lt.s32.totalorder %v1047, 0
    %v1049 = vsub.s32 0, %v1047
    %v1050 = vsel %vm1048, %v1049, %v1047
    %v1051 = vclz %v1050
    %v1052 = vsub.s32 %v1051, 2
    %vm1053 = vcmp.gt.s32.totalorder 0, %v1052
    %v1054 = vsel %vm1053, 0, %v1052
    %v1055 = vsub.s32 32, %v1054
    %v1056 = vshll.u32 %v1047, %v1054
    %v1057 = vshrl.u32 %v1039, %v1055
    %v1058 = vor.u32 %v1056, %v1057
    %v1059 = vsub.s32 4294967266, %v1054
    %v1060 = vadd.s32 %v1059, 127
    %v1061 = vshll.u32 %v1060, 23
    %v1062 = vor.u32 4788187, %v1061
    %v1063 = vand.u32 2147483647, %v1062
    %v1065 = vcvt.s32.f32 %v1058
    %v1066 = vmul.f32 %v1065, %v1063
    %v1067 = vxor.u32 %v1066, 2147483648
    %v1068 = vsel %vm947, %v1067, %v1066
    %v1069 = vsub.s32 4, %v1045
    %v1070 = vsel %vm947, %v1069, %v1045
    %v1071 = vsel %vm946, %v761, %v1068
    %v1072 = vsel %vm946, 0, %v1070
    %v1073 = vmul.f32 %v1071, %v1071
    %v1074 = vmul.f32 %v1073, -0.001358992
    %v1075 = vadd.f32 %v1074, 0.041655596
    %v1076 = vmul.f32 %v1073, %v1075
    %v1077 = vadd.f32 %v1076, -0.4999988
    %v1078 = vmul.f32 %v1073, %v1077
    %v1079 = vadd.f32 1.0, %v1078
    %v1080 = vmul.f32 %v1071, %v1071
    %v1081 = vmul.f32 %v1080, -0.00019511016
    %v1082 = vadd.f32 %v1081, 0.008332121
    %v1083 = vmul.f32 %v1080, %v1082
    %v1084 = vadd.f32 %v1083, -0.16666654
    %v1085 = vmul.f32 %v1080, %v1084
    %v1086 = vadd.f32 %v1085, 1.0
    %v1087 = vmul.f32 %v1086, %v1071
    %vm1088 = vweird.f32 %v761
    %v1089 = vadd.s32 %v1072, 3
    %v1090 = vand.u32 %v1089, 3
    %vm1091 = vcmp.lt.s32.totalorder %v1090, 2
    %vm1092 = vcmp.eq.s32.totalorder %v1090, 0
    %v1093 = vxor.u32 %v1087, 2147483648
    %v1094 = vsel %vm1092, %v1079, %v1093
    %vm1095 = vcmp.eq.s32.totalorder %v1090, 2
    %v1096 = vxor.u32 %v1079, 2147483648
    %v1097 = vsel %vm1095, %v1096, %v1087
    %v1098 = vsel %vm1091, %v1094, %v1097
    %v1099 = vsel %vm1088, nan, %v1098
    %v1100 = vadd.f32 %v944, %v774
    %v1101 = vadd.f32 %v1099, %v787
    %v1102 = vmax.f32 %v1100, 0.0
    %v1103 = vmax.f32 %v1101, 0.0
    %v1104 = vpack.c.bf16 %v1102, %v1102
    %v1105 = vpack.c.bf16 %v1103, %v1103
    %v1106 = vld [vmem:[#allocation8] sm:$0xff]
    %v1107 = vld [vmem:[#allocation8 + $0x8] sm:$0xff]
    %v1108 = vld [vmem:[#allocation8 + $0x10] sm:$0xff]
    %v1109 = vld [vmem:[#allocation8 + $0x18] sm:$0xff]
    %v1110 = vld [vmem:[#allocation8 + $0x20] sm:$0xff]
    %v1111 = vld [vmem:[#allocation8 + $0x28] sm:$0xff]
    %v1112 = vld [vmem:[#allocation8 + $0x30] sm:$0xff]
    %v1113 = vld [vmem:[#allocation8 + $0x38] sm:$0xff]
    %v1114 = vld [vmem:[#allocation8 + $0x40] sm:$0xff]
    %v1115 = vld [vmem:[#allocation8 + $0x48] sm:$0xff]
    %v1116 = vld [vmem:[#allocation8 + $0x50] sm:$0xff]
    %v1117 = vld [vmem:[#allocation8 + $0x58] sm:$0xff]
    %v1118 = vld [vmem:[#allocation8 + $0x60] sm:$0xff]
    %v1119 = vld [vmem:[#allocation8 + $0x68] sm:$0xff]
    %v1120 = vld [vmem:[#allocation8 + $0x70] sm:$0xff]
    %v1121 = vld [vmem:[#allocation8 + $0x78] sm:$0xff]
    %v1122 = vld [vmem:[#allocation8 + $0x80] sm:$0xff]
    %v1123 = vld [vmem:[#allocation8 + $0x88] sm:$0xff]
    %v1124 = vld [vmem:[#allocation8 + $0x90] sm:$0xff]
    %v1125 = vld [vmem:[#allocation8 + $0x98] sm:$0xff]
    %v1126 = vld [vmem:[#allocation8 + $0xa0] sm:$0xff]
    %v1127 = vld [vmem:[#allocation8 + $0xa8] sm:$0xff]
    %v1128 = vld [vmem:[#allocation8 + $0xb0] sm:$0xff]
    %v1129 = vld [vmem:[#allocation8 + $0xb8] sm:$0xff]
    %v1130 = vld [vmem:[#allocation8 + $0xc0] sm:$0xff]
    %v1131 = vld [vmem:[#allocation8 + $0xc8] sm:$0xff]
    %v1132 = vld [vmem:[#allocation8 + $0xd0] sm:$0xff]
    %v1133 = vld [vmem:[#allocation8 + $0xd8] sm:$0xff]
    %v1134 = vld [vmem:[#allocation8 + $0xe0] sm:$0xff]
    %v1135 = vld [vmem:[#allocation8 + $0xe8] sm:$0xff]
    %v1136 = vld [vmem:[#allocation8 + $0xf0] sm:$0xff]
    %v1137 = vld [vmem:[#allocation8 + $0xf8] sm:$0xff]
    %v1138 = vld [vmem:[#allocation8 + $0x100] sm:$0xff]
    %v1139 = vld [vmem:[#allocation8 + $0x108] sm:$0xff]
    %v1140 = vld [vmem:[#allocation8 + $0x110] sm:$0xff]
    %v1141 = vld [vmem:[#allocation8 + $0x118] sm:$0xff]
    %v1142 = vld [vmem:[#allocation8 + $0x120] sm:$0xff]
    %v1143 = vld [vmem:[#allocation8 + $0x128] sm:$0xff]
    %v1144 = vld [vmem:[#allocation8 + $0x130] sm:$0xff]
    %v1145 = vld [vmem:[#allocation8 + $0x138] sm:$0xff]
    %v1146 = vld [vmem:[#allocation8 + $0x140] sm:$0xff]
    %v1147 = vld [vmem:[#allocation8 + $0x148] sm:$0xff]
    %v1148 = vld [vmem:[#allocation8 + $0x150] sm:$0xff]
    %v1149 = vld [vmem:[#allocation8 + $0x158] sm:$0xff]
    %v1150 = vld [vmem:[#allocation8 + $0x160] sm:$0xff]
    %v1151 = vld [vmem:[#allocation8 + $0x168] sm:$0xff]
    %v1152 = vld [vmem:[#allocation8 + $0x170] sm:$0xff]
    %v1153 = vld [vmem:[#allocation8 + $0x178] sm:$0xff]
    %v1154 = vld [vmem:[#allocation8 + $0x180] sm:$0xff]
    %v1155 = vld [vmem:[#allocation8 + $0x188] sm:$0xff]
    %v1156 = vld [vmem:[#allocation8 + $0x190] sm:$0xff]
    %v1157 = vld [vmem:[#allocation8 + $0x198] sm:$0xff]
    %v1158 = vld [vmem:[#allocation8 + $0x1a0] sm:$0xff]
    %v1159 = vld [vmem:[#allocation8 + $0x1a8] sm:$0xff]
    %v1160 = vld [vmem:[#allocation8 + $0x1b0] sm:$0xff]
    %v1161 = vld [vmem:[#allocation8 + $0x1b8] sm:$0xff]
    %v1162 = vld [vmem:[#allocation8 + $0x1c0] sm:$0xff]
    %v1163 = vld [vmem:[#allocation8 + $0x1c8] sm:$0xff]
    %v1164 = vld [vmem:[#allocation8 + $0x1d0] sm:$0xff]
    %v1165 = vld [vmem:[#allocation8 + $0x1d8] sm:$0xff]
    %v1166 = vld [vmem:[#allocation8 + $0x1e0] sm:$0xff]
    %v1167 = vld [vmem:[#allocation8 + $0x1e8] sm:$0xff]
    %v1168 = vld [vmem:[#allocation8 + $0x1f0] sm:$0xff]
    %v1169 = vld [vmem:[#allocation8 + $0x1f8] sm:$0xff]
    %v1170 = vld [vmem:[#allocation8 + $0x200] sm:$0xff]
    %v1171 = vld [vmem:[#allocation8 + $0x208] sm:$0xff]
    %v1172 = vld [vmem:[#allocation8 + $0x210] sm:$0xff]
    %v1173 = vld [vmem:[#allocation8 + $0x218] sm:$0xff]
    %v1174 = vld [vmem:[#allocation8 + $0x220] sm:$0xff]
    %v1175 = vld [vmem:[#allocation8 + $0x228] sm:$0xff]
    %v1176 = vld [vmem:[#allocation8 + $0x230] sm:$0xff]
    %v1177 = vld [vmem:[#allocation8 + $0x238] sm:$0xff]
    %v1178 = vld [vmem:[#allocation8 + $0x240] sm:$0xff]
    %v1179 = vld [vmem:[#allocation8 + $0x248] sm:$0xff]
    %v1180 = vld [vmem:[#allocation8 + $0x250] sm:$0xff]
    %v1181 = vld [vmem:[#allocation8 + $0x258] sm:$0xff]
    %v1182 = vld [vmem:[#allocation8 + $0x260] sm:$0xff]
    %v1183 = vld [vmem:[#allocation8 + $0x268] sm:$0xff]
    %v1184 = vld [vmem:[#allocation8 + $0x270] sm:$0xff]
    %v1185 = vld [vmem:[#allocation8 + $0x278] sm:$0xff]
    %v1186 = vld [vmem:[#allocation8 + $0x280] sm:$0xff]
    %v1187 = vld [vmem:[#allocation8 + $0x288] sm:$0xff]
    %v1188 = vld [vmem:[#allocation8 + $0x290] sm:$0xff]
    %v1189 = vld [vmem:[#allocation8 + $0x298] sm:$0xff]
    %v1190 = vld [vmem:[#allocation8 + $0x2a0] sm:$0xff]
    %v1191 = vld [vmem:[#allocation8 + $0x2a8] sm:$0xff]
    %v1192 = vld [vmem:[#allocation8 + $0x2b0] sm:$0xff]
    %v1193 = vld [vmem:[#allocation8 + $0x2b8] sm:$0xff]
    %v1194 = vld [vmem:[#allocation8 + $0x2c0] sm:$0xff]
    %v1195 = vld [vmem:[#allocation8 + $0x2c8] sm:$0xff]
    %v1196 = vld [vmem:[#allocation8 + $0x2d0] sm:$0xff]
    %v1197 = vld [vmem:[#allocation8 + $0x2d8] sm:$0xff]
    %v1198 = vld [vmem:[#allocation8 + $0x2e0] sm:$0xff]
    %v1199 = vld [vmem:[#allocation8 + $0x2e8] sm:$0xff]
    %v1200 = vld [vmem:[#allocation8 + $0x2f0] sm:$0xff]
    %v1201 = vld [vmem:[#allocation8 + $0x2f8] sm:$0xff]
    %v1202 = vld [vmem:[#allocation8 + $0x300] sm:$0xff]
    %v1203 = vld [vmem:[#allocation8 + $0x308] sm:$0xff]
    %v1204 = vld [vmem:[#allocation8 + $0x310] sm:$0xff]
    %v1205 = vld [vmem:[#allocation8 + $0x318] sm:$0xff]
    %v1206 = vld [vmem:[#allocation8 + $0x320] sm:$0xff]
    %v1207 = vld [vmem:[#allocation8 + $0x328] sm:$0xff]
    %v1208 = vld [vmem:[#allocation8 + $0x330] sm:$0xff]
    %v1209 = vld [vmem:[#allocation8 + $0x338] sm:$0xff]
    %v1210 = vld [vmem:[#allocation8 + $0x340] sm:$0xff]
    %v1211 = vld [vmem:[#allocation8 + $0x348] sm:$0xff]
    %v1212 = vld [vmem:[#allocation8 + $0x350] sm:$0xff]
    %v1213 = vld [vmem:[#allocation8 + $0x358] sm:$0xff]
    %v1214 = vld [vmem:[#allocation8 + $0x360] sm:$0xff]
    %v1215 = vld [vmem:[#allocation8 + $0x368] sm:$0xff]
    %v1216 = vld [vmem:[#allocation8 + $0x370] sm:$0xff]
    %v1217 = vld [vmem:[#allocation8 + $0x378] sm:$0xff]
    %v1218 = vld [vmem:[#allocation8 + $0x380] sm:$0xff]
    %v1219 = vld [vmem:[#allocation8 + $0x388] sm:$0xff]
    %v1220 = vld [vmem:[#allocation8 + $0x390] sm:$0xff]
    %v1221 = vld [vmem:[#allocation8 + $0x398] sm:$0xff]
    %v1222 = vld [vmem:[#allocation8 + $0x3a0] sm:$0xff]
    %v1223 = vld [vmem:[#allocation8 + $0x3a8] sm:$0xff]
    %v1224 = vld [vmem:[#allocation8 + $0x3b0] sm:$0xff]
    %v1225 = vld [vmem:[#allocation8 + $0x3b8] sm:$0xff]
    %v1226 = vld [vmem:[#allocation8 + $0x3c0] sm:$0xff]
    %v1227 = vld [vmem:[#allocation8 + $0x3c8] sm:$0xff]
    %v1228 = vld [vmem:[#allocation8 + $0x3d0] sm:$0xff]
    %v1229 = vld [vmem:[#allocation8 + $0x3d8] sm:$0xff]
    %v1230 = vld [vmem:[#allocation8 + $0x3e0] sm:$0xff]
    %v1231 = vld [vmem:[#allocation8 + $0x3e8] sm:$0xff]
    %v1232 = vld [vmem:[#allocation8 + $0x3f0] sm:$0xff]
    %v1233 = vld [vmem:[#allocation8 + $0x3f8] sm:$0xff]
    %v1234 = vld [vmem:[%s8] sm:$0xff]
    %v1236 = vperm.slane %v1234, 0
    %v1237 = vperm.slane %v1234, 1
    %v1238 = vperm.slane %v1234, 2
    %v1239 = vperm.slane %v1234, 3
    %v1240 = vperm.slane %v1234, 4
    %v1241 = vperm.slane %v1234, 5
    %v1242 = vperm.slane %v1234, 6
    %v1243 = vperm.slane %v1234, 7
    %v1380 = vunpack.c.l.b16 %v1106
    %v1381 = vunpack.c.h.b16 %v1106
    %v1382 = vunpack.c.l.b16 %v1107
    %v1383 = vunpack.c.h.b16 %v1107
    %v1384 = vunpack.c.l.b16 %v1108
    %v1385 = vunpack.c.h.b16 %v1108
    %v1386 = vunpack.c.l.b16 %v1109
    %v1387 = vunpack.c.h.b16 %v1109
    %v1388 = vunpack.c.l.b16 %v1110
    %v1389 = vunpack.c.h.b16 %v1110
    %v1390 = vunpack.c.l.b16 %v1111
    %v1391 = vunpack.c.h.b16 %v1111
    %v1392 = vunpack.c.l.b16 %v1112
    %v1393 = vunpack.c.h.b16 %v1112
    %v1394 = vunpack.c.l.b16 %v1113
    %v1395 = vunpack.c.h.b16 %v1113
    %v1396 = vunpack.c.l.b16 %v1114
    %v1397 = vunpack.c.h.b16 %v1114
    %v1398 = vunpack.c.l.b16 %v1115
    %v1399 = vunpack.c.h.b16 %v1115
    %v1400 = vunpack.c.l.b16 %v1116
    %v1401 = vunpack.c.h.b16 %v1116
    %v1402 = vunpack.c.l.b16 %v1117
    %v1403 = vunpack.c.h.b16 %v1117
    %v1404 = vunpack.c.l.b16 %v1118
    %v1405 = vunpack.c.h.b16 %v1118
    %v1406 = vunpack.c.l.b16 %v1119
    %v1407 = vunpack.c.h.b16 %v1119
    %v1408 = vunpack.c.l.b16 %v1120
    %v1409 = vunpack.c.h.b16 %v1120
    %v1410 = vunpack.c.l.b16 %v1121
    %v1411 = vunpack.c.h.b16 %v1121
    %v1412 = vunpack.c.l.b16 %v1122
    %v1413 = vunpack.c.h.b16 %v1122
    %v1414 = vunpack.c.l.b16 %v1123
    %v1415 = vunpack.c.h.b16 %v1123
    %v1416 = vunpack.c.l.b16 %v1124
    %v1417 = vunpack.c.h.b16 %v1124
    %v1418 = vunpack.c.l.b16 %v1125
    %v1419 = vunpack.c.h.b16 %v1125
    %v1420 = vunpack.c.l.b16 %v1126
    %v1421 = vunpack.c.h.b16 %v1126
    %v1422 = vunpack.c.l.b16 %v1127
    %v1423 = vunpack.c.h.b16 %v1127
    %v1424 = vunpack.c.l.b16 %v1128
    %v1425 = vunpack.c.h.b16 %v1128
    %v1426 = vunpack.c.l.b16 %v1129
    %v1427 = vunpack.c.h.b16 %v1129
    %v1428 = vunpack.c.l.b16 %v1130
    %v1429 = vunpack.c.h.b16 %v1130
    %v1430 = vunpack.c.l.b16 %v1131
    %v1431 = vunpack.c.h.b16 %v1131
    %v1432 = vunpack.c.l.b16 %v1132
    %v1433 = vunpack.c.h.b16 %v1132
    %v1434 = vunpack.c.l.b16 %v1133
    %v1435 = vunpack.c.h.b16 %v1133
    %v1436 = vunpack.c.l.b16 %v1134
    %v1437 = vunpack.c.h.b16 %v1134
    %v1438 = vunpack.c.l.b16 %v1135
    %v1439 = vunpack.c.h.b16 %v1135
    %v1440 = vunpack.c.l.b16 %v1136
    %v1441 = vunpack.c.h.b16 %v1136
    %v1442 = vunpack.c.l.b16 %v1137
    %v1443 = vunpack.c.h.b16 %v1137
    %v1444 = vunpack.c.l.b16 %v1138
    %v1445 = vunpack.c.h.b16 %v1138
    %v1446 = vunpack.c.l.b16 %v1139
    %v1447 = vunpack.c.h.b16 %v1139
    %v1448 = vunpack.c.l.b16 %v1140
    %v1449 = vunpack.c.h.b16 %v1140
    %v1450 = vunpack.c.l.b16 %v1141
    %v1451 = vunpack.c.h.b16 %v1141
    %v1452 = vunpack.c.l.b16 %v1142
    %v1453 = vunpack.c.h.b16 %v1142
    %v1454 = vunpack.c.l.b16 %v1143
    %v1455 = vunpack.c.h.b16 %v1143
    %v1456 = vunpack.c.l.b16 %v1144
    %v1457 = vunpack.c.h.b16 %v1144
    %v1458 = vunpack.c.l.b16 %v1145
    %v1459 = vunpack.c.h.b16 %v1145
    %v1460 = vunpack.c.l.b16 %v1146
    %v1461 = vunpack.c.h.b16 %v1146
    %v1462 = vunpack.c.l.b16 %v1147
    %v1463 = vunpack.c.h.b16 %v1147
    %v1464 = vunpack.c.l.b16 %v1148
    %v1465 = vunpack.c.h.b16 %v1148
    %v1466 = vunpack.c.l.b16 %v1149
    %v1467 = vunpack.c.h.b16 %v1149
    %v1468 = vunpack.c.l.b16 %v1150
    %v1469 = vunpack.c.h.b16 %v1150
    %v1470 = vunpack.c.l.b16 %v1151
    %v1471 = vunpack.c.h.b16 %v1151
    %v1472 = vunpack.c.l.b16 %v1152
    %v1473 = vunpack.c.h.b16 %v1152
    %v1474 = vunpack.c.l.b16 %v1153
    %v1475 = vunpack.c.h.b16 %v1153
    %v1476 = vunpack.c.l.b16 %v1154
    %v1477 = vunpack.c.h.b16 %v1154
    %v1478 = vunpack.c.l.b16 %v1155
    %v1479 = vunpack.c.h.b16 %v1155
    %v1480 = vunpack.c.l.b16 %v1156
    %v1481 = vunpack.c.h.b16 %v1156
    %v1482 = vunpack.c.l.b16 %v1157
    %v1483 = vunpack.c.h.b16 %v1157
    %v1484 = vunpack.c.l.b16 %v1158
    %v1485 = vunpack.c.h.b16 %v1158
    %v1486 = vunpack.c.l.b16 %v1159
    %v1487 = vunpack.c.h.b16 %v1159
    %v1488 = vunpack.c.l.b16 %v1160
    %v1489 = vunpack.c.h.b16 %v1160
    %v1490 = vunpack.c.l.b16 %v1161
    %v1491 = vunpack.c.h.b16 %v1161
    %v1492 = vunpack.c.l.b16 %v1162
    %v1493 = vunpack.c.h.b16 %v1162
    %v1494 = vunpack.c.l.b16 %v1163
    %v1495 = vunpack.c.h.b16 %v1163
    %v1496 = vunpack.c.l.b16 %v1164
    %v1497 = vunpack.c.h.b16 %v1164
    %v1498 = vunpack.c.l.b16 %v1165
    %v1499 = vunpack.c.h.b16 %v1165
    %v1500 = vunpack.c.l.b16 %v1166
    %v1501 = vunpack.c.h.b16 %v1166
    %v1502 = vunpack.c.l.b16 %v1167
    %v1503 = vunpack.c.h.b16 %v1167
    %v1504 = vunpack.c.l.b16 %v1168
    %v1505 = vunpack.c.h.b16 %v1168
    %v1506 = vunpack.c.l.b16 %v1169
    %v1507 = vunpack.c.h.b16 %v1169
    %v1508 = vunpack.c.l.b16 %v1170
    %v1509 = vunpack.c.h.b16 %v1170
    %v1510 = vunpack.c.l.b16 %v1171
    %v1511 = vunpack.c.h.b16 %v1171
    %v1512 = vunpack.c.l.b16 %v1172
    %v1513 = vunpack.c.h.b16 %v1172
    %v1514 = vunpack.c.l.b16 %v1173
    %v1515 = vunpack.c.h.b16 %v1173
    %v1516 = vunpack.c.l.b16 %v1174
    %v1517 = vunpack.c.h.b16 %v1174
    %v1518 = vunpack.c.l.b16 %v1175
    %v1519 = vunpack.c.h.b16 %v1175
    %v1520 = vunpack.c.l.b16 %v1176
    %v1521 = vunpack.c.h.b16 %v1176
    %v1522 = vunpack.c.l.b16 %v1177
    %v1523 = vunpack.c.h.b16 %v1177
    %v1524 = vunpack.c.l.b16 %v1178
    %v1525 = vunpack.c.h.b16 %v1178
    %v1526 = vunpack.c.l.b16 %v1179
    %v1527 = vunpack.c.h.b16 %v1179
    %v1528 = vunpack.c.l.b16 %v1180
    %v1529 = vunpack.c.h.b16 %v1180
    %v1530 = vunpack.c.l.b16 %v1181
    %v1531 = vunpack.c.h.b16 %v1181
    %v1532 = vunpack.c.l.b16 %v1182
    %v1533 = vunpack.c.h.b16 %v1182
    %v1534 = vunpack.c.l.b16 %v1183
    %v1535 = vunpack.c.h.b16 %v1183
    %v1536 = vunpack.c.l.b16 %v1184
    %v1537 = vunpack.c.h.b16 %v1184
    %v1538 = vunpack.c.l.b16 %v1185
    %v1539 = vunpack.c.h.b16 %v1185
    %v1540 = vunpack.c.l.b16 %v1186
    %v1541 = vunpack.c.h.b16 %v1186
    %v1542 = vunpack.c.l.b16 %v1187
    %v1543 = vunpack.c.h.b16 %v1187
    %v1544 = vunpack.c.l.b16 %v1188
    %v1545 = vunpack.c.h.b16 %v1188
    %v1546 = vunpack.c.l.b16 %v1189
    %v1547 = vunpack.c.h.b16 %v1189
    %v1548 = vunpack.c.l.b16 %v1190
    %v1549 = vunpack.c.h.b16 %v1190
    %v1550 = vunpack.c.l.b16 %v1191
    %v1551 = vunpack.c.h.b16 %v1191
    %v1552 = vunpack.c.l.b16 %v1192
    %v1553 = vunpack.c.h.b16 %v1192
    %v1554 = vunpack.c.l.b16 %v1193
    %v1555 = vunpack.c.h.b16 %v1193
    %v1556 = vunpack.c.l.b16 %v1194
    %v1557 = vunpack.c.h.b16 %v1194
    %v1558 = vunpack.c.l.b16 %v1195
    %v1559 = vunpack.c.h.b16 %v1195
    %v1560 = vunpack.c.l.b16 %v1196
    %v1561 = vunpack.c.h.b16 %v1196
    %v1562 = vunpack.c.l.b16 %v1197
    %v1563 = vunpack.c.h.b16 %v1197
    %v1564 = vunpack.c.l.b16 %v1198
    %v1565 = vunpack.c.h.b16 %v1198
    %v1566 = vunpack.c.l.b16 %v1199
    %v1567 = vunpack.c.h.b16 %v1199
    %v1568 = vunpack.c.l.b16 %v1200
    %v1569 = vunpack.c.h.b16 %v1200
    %v1570 = vunpack.c.l.b16 %v1201
    %v1571 = vunpack.c.h.b16 %v1201
    %v1572 = vunpack.c.l.b16 %v1202
    %v1573 = vunpack.c.h.b16 %v1202
    %v1574 = vunpack.c.l.b16 %v1203
    %v1575 = vunpack.c.h.b16 %v1203
    %v1576 = vunpack.c.l.b16 %v1204
    %v1577 = vunpack.c.h.b16 %v1204
    %v1578 = vunpack.c.l.b16 %v1205
    %v1579 = vunpack.c.h.b16 %v1205
    %v1580 = vunpack.c.l.b16 %v1206
    %v1581 = vunpack.c.h.b16 %v1206
    %v1582 = vunpack.c.l.b16 %v1207
    %v1583 = vunpack.c.h.b16 %v1207
    %v1584 = vunpack.c.l.b16 %v1208
    %v1585 = vunpack.c.h.b16 %v1208
    %v1586 = vunpack.c.l.b16 %v1209
    %v1587 = vunpack.c.h.b16 %v1209
    %v1588 = vunpack.c.l.b16 %v1210
    %v1589 = vunpack.c.h.b16 %v1210
    %v1590 = vunpack.c.l.b16 %v1211
    %v1591 = vunpack.c.h.b16 %v1211
    %v1592 = vunpack.c.l.b16 %v1212
    %v1593 = vunpack.c.h.b16 %v1212
    %v1594 = vunpack.c.l.b16 %v1213
    %v1595 = vunpack.c.h.b16 %v1213
    %v1596 = vunpack.c.l.b16 %v1214
    %v1597 = vunpack.c.h.b16 %v1214
    %v1598 = vunpack.c.l.b16 %v1215
    %v1599 = vunpack.c.h.b16 %v1215
    %v1600 = vunpack.c.l.b16 %v1216
    %v1601 = vunpack.c.h.b16 %v1216
    %v1602 = vunpack.c.l.b16 %v1217
    %v1603 = vunpack.c.h.b16 %v1217
    %v1604 = vunpack.c.l.b16 %v1218
    %v1605 = vunpack.c.h.b16 %v1218
    %v1606 = vunpack.c.l.b16 %v1219
    %v1607 = vunpack.c.h.b16 %v1219
    %v1608 = vunpack.c.l.b16 %v1220
    %v1609 = vunpack.c.h.b16 %v1220
    %v1610 = vunpack.c.l.b16 %v1221
    %v1611 = vunpack.c.h.b16 %v1221
    %v1612 = vunpack.c.l.b16 %v1222
    %v1613 = vunpack.c.h.b16 %v1222
    %v1614 = vunpack.c.l.b16 %v1223
    %v1615 = vunpack.c.h.b16 %v1223
    %v1616 = vunpack.c.l.b16 %v1224
    %v1617 = vunpack.c.h.b16 %v1224
    %v1618 = vunpack.c.l.b16 %v1225
    %v1619 = vunpack.c.h.b16 %v1225
    %v1620 = vunpack.c.l.b16 %v1226
    %v1621 = vunpack.c.h.b16 %v1226
    %v1622 = vunpack.c.l.b16 %v1227
    %v1623 = vunpack.c.h.b16 %v1227
    %v1624 = vunpack.c.l.b16 %v1228
    %v1625 = vunpack.c.h.b16 %v1228
    %v1626 = vunpack.c.l.b16 %v1229
    %v1627 = vunpack.c.h.b16 %v1229
    %v1628 = vunpack.c.l.b16 %v1230
    %v1629 = vunpack.c.h.b16 %v1230
    %v1630 = vunpack.c.l.b16 %v1231
    %v1631 = vunpack.c.h.b16 %v1231
    %v1632 = vunpack.c.l.b16 %v1232
    %v1633 = vunpack.c.h.b16 %v1232
    %v1634 = vunpack.c.l.b16 %v1233
    %v1635 = vunpack.c.h.b16 %v1233
    %v1636 = vpack.c.b16 %v1388, %v1380
    %v1637 = vpack.c.b16 %v1389, %v1381
    %v1638 = vpack.c.b16 %v1390, %v1382
    %v1639 = vpack.c.b16 %v1391, %v1383
    %v1640 = vpack.c.b16 %v1392, %v1384
    %v1641 = vpack.c.b16 %v1393, %v1385
    %v1642 = vpack.c.b16 %v1394, %v1386
    %v1643 = vpack.c.b16 %v1395, %v1387
    %v1644 = vpack.c.b16 %v1404, %v1396
    %v1645 = vpack.c.b16 %v1405, %v1397
    %v1646 = vpack.c.b16 %v1406, %v1398
    %v1647 = vpack.c.b16 %v1407, %v1399
    %v1648 = vpack.c.b16 %v1408, %v1400
    %v1649 = vpack.c.b16 %v1409, %v1401
    %v1650 = vpack.c.b16 %v1410, %v1402
    %v1651 = vpack.c.b16 %v1411, %v1403
    %v1652 = vpack.c.b16 %v1420, %v1412
    %v1653 = vpack.c.b16 %v1421, %v1413
    %v1654 = vpack.c.b16 %v1422, %v1414
    %v1655 = vpack.c.b16 %v1423, %v1415
    %v1656 = vpack.c.b16 %v1424, %v1416
    %v1657 = vpack.c.b16 %v1425, %v1417
    %v1658 = vpack.c.b16 %v1426, %v1418
    %v1659 = vpack.c.b16 %v1427, %v1419
    %v1660 = vpack.c.b16 %v1436, %v1428
    %v1661 = vpack.c.b16 %v1437, %v1429
    %v1662 = vpack.c.b16 %v1438, %v1430
    %v1663 = vpack.c.b16 %v1439, %v1431
    %v1664 = vpack.c.b16 %v1440, %v1432
    %v1665 = vpack.c.b16 %v1441, %v1433
    %v1666 = vpack.c.b16 %v1442, %v1434
    %v1667 = vpack.c.b16 %v1443, %v1435
    %v1668 = vpack.c.b16 %v1452, %v1444
    %v1669 = vpack.c.b16 %v1453, %v1445
    %v1670 = vpack.c.b16 %v1454, %v1446
    %v1671 = vpack.c.b16 %v1455, %v1447
    %v1672 = vpack.c.b16 %v1456, %v1448
    %v1673 = vpack.c.b16 %v1457, %v1449
    %v1674 = vpack.c.b16 %v1458, %v1450
    %v1675 = vpack.c.b16 %v1459, %v1451
    %v1676 = vpack.c.b16 %v1468, %v1460
    %v1677 = vpack.c.b16 %v1469, %v1461
    %v1678 = vpack.c.b16 %v1470, %v1462
    %v1679 = vpack.c.b16 %v1471, %v1463
    %v1680 = vpack.c.b16 %v1472, %v1464
    %v1681 = vpack.c.b16 %v1473, %v1465
    %v1682 = vpack.c.b16 %v1474, %v1466
    %v1683 = vpack.c.b16 %v1475, %v1467
    %v1684 = vpack.c.b16 %v1484, %v1476
    %v1685 = vpack.c.b16 %v1485, %v1477
    %v1686 = vpack.c.b16 %v1486, %v1478
    %v1687 = vpack.c.b16 %v1487, %v1479
    %v1688 = vpack.c.b16 %v1488, %v1480
    %v1689 = vpack.c.b16 %v1489, %v1481
    %v1690 = vpack.c.b16 %v1490, %v1482
    %v1691 = vpack.c.b16 %v1491, %v1483
    %v1692 = vpack.c.b16 %v1500, %v1492
    %v1693 = vpack.c.b16 %v1501, %v1493
    %v1694 = vpack.c.b16 %v1502, %v1494
    %v1695 = vpack.c.b16 %v1503, %v1495
    %v1696 = vpack.c.b16 %v1504, %v1496
    %v1697 = vpack.c.b16 %v1505, %v1497
    %v1698 = vpack.c.b16 %v1506, %v1498
    %v1699 = vpack.c.b16 %v1507, %v1499
    %v1700 = vpack.c.b16 %v1516, %v1508
    %v1701 = vpack.c.b16 %v1517, %v1509
    %v1702 = vpack.c.b16 %v1518, %v1510
    %v1703 = vpack.c.b16 %v1519, %v1511
    %v1704 = vpack.c.b16 %v1520, %v1512
    %v1705 = vpack.c.b16 %v1521, %v1513
    %v1706 = vpack.c.b16 %v1522, %v1514
    %v1707 = vpack.c.b16 %v1523, %v1515
    %v1708 = vpack.c.b16 %v1532, %v1524
    %v1709 = vpack.c.b16 %v1533, %v1525
    %v1710 = vpack.c.b16 %v1534, %v1526
    %v1711 = vpack.c.b16 %v1535, %v1527
    %v1712 = vpack.c.b16 %v1536, %v1528
    %v1713 = vpack.c.b16 %v1537, %v1529
    %v1714 = vpack.c.b16 %v1538, %v1530
    %v1715 = vpack.c.b16 %v1539, %v1531
    %v1716 = vpack.c.b16 %v1548, %v1540
    %v1717 = vpack.c.b16 %v1549, %v1541
    %v1718 = vpack.c.b16 %v1550, %v1542
    %v1719 = vpack.c.b16 %v1551, %v1543
    %v1720 = vpack.c.b16 %v1552, %v1544
    %v1721 = vpack.c.b16 %v1553, %v1545
    %v1722 = vpack.c.b16 %v1554, %v1546
    %v1723 = vpack.c.b16 %v1555, %v1547
    %v1724 = vpack.c.b16 %v1564, %v1556
    %v1725 = vpack.c.b16 %v1565, %v1557
    %v1726 = vpack.c.b16 %v1566, %v1558
    %v1727 = vpack.c.b16 %v1567, %v1559
    %v1728 = vpack.c.b16 %v1568, %v1560
    %v1729 = vpack.c.b16 %v1569, %v1561
    %v1730 = vpack.c.b16 %v1570, %v1562
    %v1731 = vpack.c.b16 %v1571, %v1563
    %v1732 = vpack.c.b16 %v1580, %v1572
    %v1733 = vpack.c.b16 %v1581, %v1573
    %v1734 = vpack.c.b16 %v1582, %v1574
    %v1735 = vpack.c.b16 %v1583, %v1575
    %v1736 = vpack.c.b16 %v1584, %v1576
    %v1737 = vpack.c.b16 %v1585, %v1577
    %v1738 = vpack.c.b16 %v1586, %v1578
    %v1739 = vpack.c.b16 %v1587, %v1579
    %v1740 = vpack.c.b16 %v1596, %v1588
    %v1741 = vpack.c.b16 %v1597, %v1589
    %v1742 = vpack.c.b16 %v1598, %v1590
    %v1743 = vpack.c.b16 %v1599, %v1591
    %v1744 = vpack.c.b16 %v1600, %v1592
    %v1745 = vpack.c.b16 %v1601, %v1593
    %v1746 = vpack.c.b16 %v1602, %v1594
    %v1747 = vpack.c.b16 %v1603, %v1595
    %v1748 = vpack.c.b16 %v1612, %v1604
    %v1749 = vpack.c.b16 %v1613, %v1605
    %v1750 = vpack.c.b16 %v1614, %v1606
    %v1751 = vpack.c.b16 %v1615, %v1607
    %v1752 = vpack.c.b16 %v1616, %v1608
    %v1753 = vpack.c.b16 %v1617, %v1609
    %v1754 = vpack.c.b16 %v1618, %v1610
    %v1755 = vpack.c.b16 %v1619, %v1611
    %v1756 = vpack.c.b16 %v1628, %v1620
    %v1757 = vpack.c.b16 %v1629, %v1621
    %v1758 = vpack.c.b16 %v1630, %v1622
    %v1759 = vpack.c.b16 %v1631, %v1623
    %v1760 = vpack.c.b16 %v1632, %v1624
    %v1761 = vpack.c.b16 %v1633, %v1625
    %v1762 = vpack.c.b16 %v1634, %v1626
    %v1763 = vpack.c.b16 %v1635, %v1627
    %1892 = vmatpush.bf16.msra.mxu0 %v1692
    %1893 = vmatpush.bf16.msra.mxu0 %v1684
    %1894 = vmatpush.bf16.msra.mxu0 %v1676
    %1895 = vmatpush.bf16.msra.mxu0 %v1668
    %1896 = vmatpush.bf16.msra.mxu0 %v1660
    %1897 = vmatpush.bf16.msra.mxu0 %v1652
    %1898 = vmatpush.bf16.msra.mxu0 %v1644
    %1899 = vmatpush.bf16.msra.mxu0 %v1636
    %1900 = vmatmul.bf16.gmra.mxu0 %v1104
    %v1901 = vpop.f32.mrf.mxu0
    %v1902 = vadd.f32 %v1236, %v1901
    %v1903 = vpop.f32.mrf.mxu0
    %1904 = vdwg.mxu0
    %1905 = vmatpush.bf16.msra.mxu0 %v1756
    %1906 = vmatpush.bf16.msra.mxu0 %v1748
    %1907 = vmatpush.bf16.msra.mxu0 %v1740
    %1908 = vmatpush.bf16.msra.mxu0 %v1732
    %1909 = vmatpush.bf16.msra.mxu0 %v1724
    %1910 = vmatpush.bf16.msra.mxu0 %v1716
    %1911 = vmatpush.bf16.msra.mxu0 %v1708
    %1912 = vmatpush.bf16.msra.mxu0 %v1700
    %1913 = vmatmul.bf16.gmra.mxu0 %v1105
    %v1914 = vpop.f32.mrf.mxu0
    %v1915 = vadd.f32 %v1902, %v1914
    %v1916 = vpop.f32.mrf.mxu0
    %1917 = vdwg.mxu0
    %1918 = vmatpush.bf16.msra.mxu0 %v1693
    %1919 = vmatpush.bf16.msra.mxu0 %v1685
    %1920 = vmatpush.bf16.msra.mxu0 %v1677
    %1921 = vmatpush.bf16.msra.mxu0 %v1669
    %1922 = vmatpush.bf16.msra.mxu0 %v1661
    %1923 = vmatpush.bf16.msra.mxu0 %v1653
    %1924 = vmatpush.bf16.msra.mxu0 %v1645
    %1925 = vmatpush.bf16.msra.mxu0 %v1637
    %1926 = vmatmul.bf16.gmra.mxu0 %v1104
    %v1927 = vpop.f32.mrf.mxu0
    %v1928 = vadd.f32 %v1237, %v1927
    %v1929 = vpop.f32.mrf.mxu0
    %1930 = vdwg.mxu0
    %1931 = vmatpush.bf16.msra.mxu0 %v1757
    %1932 = vmatpush.bf16.msra.mxu0 %v1749
    %1933 = vmatpush.bf16.msra.mxu0 %v1741
    %1934 = vmatpush.bf16.msra.mxu0 %v1733
    %1935 = vmatpush.bf16.msra.mxu0 %v1725
    %1936 = vmatpush.bf16.msra.mxu0 %v1717
    %1937 = vmatpush.bf16.msra.mxu0 %v1709
    %1938 = vmatpush.bf16.msra.mxu0 %v1701
    %1939 = vmatmul.bf16.gmra.mxu0 %v1105
    %v1940 = vpop.f32.mrf.mxu0
    %v1941 = vadd.f32 %v1928, %v1940
    %v1942 = vpop.f32.mrf.mxu0
    %1943 = vdwg.mxu0
    %1944 = vmatpush.bf16.msra.mxu0 %v1694
    %1945 = vmatpush.bf16.msra.mxu0 %v1686
    %1946 = vmatpush.bf16.msra.mxu0 %v1678
    %1947 = vmatpush.bf16.msra.mxu0 %v1670
    %1948 = vmatpush.bf16.msra.mxu0 %v1662
    %1949 = vmatpush.bf16.msra.mxu0 %v1654
    %1950 = vmatpush.bf16.msra.mxu0 %v1646
    %1951 = vmatpush.bf16.msra.mxu0 %v1638
    %1952 = vmatmul.bf16.gmra.mxu0 %v1104
    %v1953 = vpop.f32.mrf.mxu0
    %v1954 = vadd.f32 %v1238, %v1953
    %v1955 = vpop.f32.mrf.mxu0
    %1956 = vdwg.mxu0
    %1957 = vmatpush.bf16.msra.mxu0 %v1758
    %1958 = vmatpush.bf16.msra.mxu0 %v1750
    %1959 = vmatpush.bf16.msra.mxu0 %v1742
    %1960 = vmatpush.bf16.msra.mxu0 %v1734
    %1961 = vmatpush.bf16.msra.mxu0 %v1726
    %1962 = vmatpush.bf16.msra.mxu0 %v1718
    %1963 = vmatpush.bf16.msra.mxu0 %v1710
    %1964 = vmatpush.bf16.msra.mxu0 %v1702
    %1965 = vmatmul.bf16.gmra.mxu0 %v1105
    %v1966 = vpop.f32.mrf.mxu0
    %v1967 = vadd.f32 %v1954, %v1966
    %v1968 = vpop.f32.mrf.mxu0
    %1969 = vdwg.mxu0
    %1970 = vmatpush.bf16.msra.mxu0 %v1695
    %1971 = vmatpush.bf16.msra.mxu0 %v1687
    %1972 = vmatpush.bf16.msra.mxu0 %v1679
    %1973 = vmatpush.bf16.msra.mxu0 %v1671
    %1974 = vmatpush.bf16.msra.mxu0 %v1663
    %1975 = vmatpush.bf16.msra.mxu0 %v1655
    %1976 = vmatpush.bf16.msra.mxu0 %v1647
    %1977 = vmatpush.bf16.msra.mxu0 %v1639
    %1978 = vmatmul.bf16.gmra.mxu0 %v1104
    %v1979 = vpop.f32.mrf.mxu0
    %v1980 = vadd.f32 %v1239, %v1979
    %v1981 = vpop.f32.mrf.mxu0
    %1982 = vdwg.mxu0
    %1983 = vmatpush.bf16.msra.mxu0 %v1759
    %1984 = vmatpush.bf16.msra.mxu0 %v1751
    %1985 = vmatpush.bf16.msra.mxu0 %v1743
    %1986 = vmatpush.bf16.msra.mxu0 %v1735
    %1987 = vmatpush.bf16.msra.mxu0 %v1727
    %1988 = vmatpush.bf16.msra.mxu0 %v1719
    %1989 = vmatpush.bf16.msra.mxu0 %v1711
    %1990 = vmatpush.bf16.msra.mxu0 %v1703
    %1991 = vmatmul.bf16.gmra.mxu0 %v1105
    %v1992 = vpop.f32.mrf.mxu0
    %v1993 = vadd.f32 %v1980, %v1992
    %v1994 = vpop.f32.mrf.mxu0
    %1995 = vdwg.mxu0
    %1996 = vmatpush.bf16.msra.mxu0 %v1696
    %1997 = vmatpush.bf16.msra.mxu0 %v1688
    %1998 = vmatpush.bf16.msra.mxu0 %v1680
    %1999 = vmatpush.bf16.msra.mxu0 %v1672
    %2000 = vmatpush.bf16.msra.mxu0 %v1664
    %2001 = vmatpush.bf16.msra.mxu0 %v1656
    %2002 = vmatpush.bf16.msra.mxu0 %v1648
    %2003 = vmatpush.bf16.msra.mxu0 %v1640
    %2004 = vmatmul.bf16.gmra.mxu0 %v1104
    %v2005 = vpop.f32.mrf.mxu0
    %v2006 = vadd.f32 %v1240, %v2005
    %v2007 = vpop.f32.mrf.mxu0
    %2008 = vdwg.mxu0
    %2009 = vmatpush.bf16.msra.mxu0 %v1760
    %2010 = vmatpush.bf16.msra.mxu0 %v1752
    %2011 = vmatpush.bf16.msra.mxu0 %v1744
    %2012 = vmatpush.bf16.msra.mxu0 %v1736
    %2013 = vmatpush.bf16.msra.mxu0 %v1728
    %2014 = vmatpush.bf16.msra.mxu0 %v1720
    %2015 = vmatpush.bf16.msra.mxu0 %v1712
    %2016 = vmatpush.bf16.msra.mxu0 %v1704
    %2017 = vmatmul.bf16.gmra.mxu0 %v1105
    %v2018 = vpop.f32.mrf.mxu0
    %v2019 = vadd.f32 %v2006, %v2018
    %v2020 = vpop.f32.mrf.mxu0
    %2021 = vdwg.mxu0
    %2022 = vmatpush.bf16.msra.mxu0 %v1697
    %2023 = vmatpush.bf16.msra.mxu0 %v1689
    %2024 = vmatpush.bf16.msra.mxu0 %v1681
    %2025 = vmatpush.bf16.msra.mxu0 %v1673
    %2026 = vmatpush.bf16.msra.mxu0 %v1665
    %2027 = vmatpush.bf16.msra.mxu0 %v1657
    %2028 = vmatpush.bf16.msra.mxu0 %v1649
    %2029 = vmatpush.bf16.msra.mxu0 %v1641
    %2030 = vmatmul.bf16.gmra.mxu0 %v1104
    %v2031 = vpop.f32.mrf.mxu0
    %v2032 = vadd.f32 %v1241, %v2031
    %v2033 = vpop.f32.mrf.mxu0
    %2034 = vdwg.mxu0
    %2035 = vmatpush.bf16.msra.mxu0 %v1761
    %2036 = vmatpush.bf16.msra.mxu0 %v1753
    %2037 = vmatpush.bf16.msra.mxu0 %v1745
    %2038 = vmatpush.bf16.msra.mxu0 %v1737
    %2039 = vmatpush.bf16.msra.mxu0 %v1729
    %2040 = vmatpush.bf16.msra.mxu0 %v1721
    %2041 = vmatpush.bf16.msra.mxu0 %v1713
    %2042 = vmatpush.bf16.msra.mxu0 %v1705
    %2043 = vmatmul.bf16.gmra.mxu0 %v1105
    %v2044 = vpop.f32.mrf.mxu0
    %v2045 = vadd.f32 %v2032, %v2044
    %v2046 = vpop.f32.mrf.mxu0
    %2047 = vdwg.mxu0
    %2048 = vmatpush.bf16.msra.mxu0 %v1698
    %2049 = vmatpush.bf16.msra.mxu0 %v1690
    %2050 = vmatpush.bf16.msra.mxu0 %v1682
    %2051 = vmatpush.bf16.msra.mxu0 %v1674
    %2052 = vmatpush.bf16.msra.mxu0 %v1666
    %2053 = vmatpush.bf16.msra.mxu0 %v1658
    %2054 = vmatpush.bf16.msra.mxu0 %v1650
    %2055 = vmatpush.bf16.msra.mxu0 %v1642
    %2056 = vmatmul.bf16.gmra.mxu0 %v1104
    %v2057 = vpop.f32.mrf.mxu0
    %v2058 = vadd.f32 %v1242, %v2057
    %v2059 = vpop.f32.mrf.mxu0
    %2060 = vdwg.mxu0
    %2061 = vmatpush.bf16.msra.mxu0 %v1762
    %2062 = vmatpush.bf16.msra.mxu0 %v1754
    %2063 = vmatpush.bf16.msra.mxu0 %v1746
    %2064 = vmatpush.bf16.msra.mxu0 %v1738
    %2065 = vmatpush.bf16.msra.mxu0 %v1730
    %2066 = vmatpush.bf16.msra.mxu0 %v1722
    %2067 = vmatpush.bf16.msra.mxu0 %v1714
    %2068 = vmatpush.bf16.msra.mxu0 %v1706
    %2069 = vmatmul.bf16.gmra.mxu0 %v1105
    %v2070 = vpop.f32.mrf.mxu0
    %v2071 = vadd.f32 %v2058, %v2070
    %v2072 = vpop.f32.mrf.mxu0
    %2073 = vdwg.mxu0
    %2074 = vmatpush.bf16.msra.mxu0 %v1699
    %2075 = vmatpush.bf16.msra.mxu0 %v1691
    %2076 = vmatpush.bf16.msra.mxu0 %v1683
    %2077 = vmatpush.bf16.msra.mxu0 %v1675
    %2078 = vmatpush.bf16.msra.mxu0 %v1667
    %2079 = vmatpush.bf16.msra.mxu0 %v1659
    %2080 = vmatpush.bf16.msra.mxu0 %v1651
    %2081 = vmatpush.bf16.msra.mxu0 %v1643
    %2082 = vmatmul.bf16.gmra.mxu0 %v1104
    %v2083 = vpop.f32.mrf.mxu0
    %v2084 = vadd.f32 %v1243, %v2083
    %v2085 = vpop.f32.mrf.mxu0
    %2086 = vdwg.mxu0
    %2087 = vmatpush.bf16.msra.mxu0 %v1763
    %2088 = vmatpush.bf16.msra.mxu0 %v1755
    %2089 = vmatpush.bf16.msra.mxu0 %v1747
    %2090 = vmatpush.bf16.msra.mxu0 %v1739
    %2091 = vmatpush.bf16.msra.mxu0 %v1731
    %2092 = vmatpush.bf16.msra.mxu0 %v1723
    %2093 = vmatpush.bf16.msra.mxu0 %v1715
    %2094 = vmatpush.bf16.msra.mxu0 %v1707
    %2095 = vmatmul.bf16.gmra.mxu0 %v1105
    %v2096 = vpop.f32.mrf.mxu0
    %v2097 = vadd.f32 %v2084, %v2096
    %v2098 = vpop.f32.mrf.mxu0
    %2099 = vdwg.mxu0
    %v2100 = vand.u32 2147483647, %v1915
    %vm2101 = vcmp.le.f32.partialorder %v2100, 0.7853982
    %vm2102 = vcmp.lt.s32.totalorder %v1915, 0
    %v2103 = vand.u32 %v1915, 2139095040
    %v2104 = vshrl.u32 %v2103, 23
    %v2105 = vsub.s32 %v2104, 127
    %v2106 = vand.u32 2147483647, %v1915
    %v2107 = vand.u32 %v2106, 8388607
    %v2108 = vor.u32 %v2107, 8388608
    %v2109 = vsub.s32 0, %v2108
    %v2110 = vadd.s32 %v2105, 1
    %vm2111 = vcmp.gt.s32.totalorder %v2110, 0
    %v2112 = vsel %vm2111, %v2110, 0
    %v2113 = vshrl.u32 %v2112, 5
    %v2114 = vand.u32 %v2112, 31
    %v2115 = vsub.s32 32, %v2114
    %v2116 = vshrl.u32 683565275, %v2115
    %v2117 = vshll.u32 683565275, %v2114
    %v2118 = vshrl.u32 2475754826, %v2115
    %v2119 = vor.u32 %v2117, %v2118
    %v2120 = vshll.u32 2475754826, %v2114
    %v2121 = vshrl.u32 2131351028, %v2115
    %v2122 = vor.u32 %v2120, %v2121
    %v2123 = vshll.u32 2131351028, %v2114
    %v2124 = vshrl.u32 2102212464, %v2115
    %v2125 = vor.u32 %v2123, %v2124
    %v2126 = vshll.u32 2102212464, %v2114
    %v2127 = vshrl.u32 920167782, %v2115
    %v2128 = vor.u32 %v2126, %v2127
    %v2129 = vshll.u32 920167782, %v2114
    %v2130 = vshrl.u32 1326507024, %v2115
    %v2131 = vor.u32 %v2129, %v2130
    %vm2132 = vcmp.lt.s32.totalorder %v2113, 1
    %vm2133 = vcmp.lt.s32.totalorder %v2113, 2
    %vm2134 = vcmp.lt.s32.totalorder %v2113, 3
    %vm2135 = vcmp.lt.s32.totalorder %v2113, 4
    %v2136 = vsel %vm2132, %v2116, %v2119
    %v2137 = vsel %vm2135, %v2125, 2102212464
    %v2138 = vsel %vm2134, %v2122, %v2137
    %v2139 = vsel %vm2133, %v2136, %v2138
    %v2140 = vsel %vm2132, %v2119, %v2122
    %v2141 = vsel %vm2135, %v2128, 920167782
    %v2142 = vsel %vm2134, %v2125, %v2141
    %v2143 = vsel %vm2133, %v2140, %v2142
    %v2144 = vsel %vm2132, %v2122, %v2125
    %v2145 = vsel %vm2135, %v2131, 1326507024
    %v2146 = vsel %vm2134, %v2128, %v2145
    %v2147 = vsel %vm2133, %v2144, %v2146
    %v2148 = vshll.u32 %v2108, 8
    %v2149 = vand.u32 %v2148, 65535
    %v2150 = vshrl.u32 %v2148, 16
    %v2151 = vand.u32 %v2147, 65535
    %v2152 = vshrl.u32 %v2147, 16
    %v2153 = vmul.u32 %v2149, %v2151
    %v2154 = vmul.u32 %v2149, %v2152
    %v2155 = vmul.u32 %v2150, %v2151
    %v2156 = vmul.u32 %v2150, %v2152
    %v2157 = vshll.u32 %v2154, 16
    %v2158 = vshrl.u32 %v2154, 16
    %v2159 = vshll.u32 %v2155, 16
    %v2160 = vshrl.u32 %v2155, 16
    %vm2161 = vc.u32 %v2153, %v2157
    %v2162 = vsel %vm2161, 1, 0
    %v2163 = vadd.s32 %v2153, %v2157
    %v2164 = vadd.s32 %v2156, %v2162
    %vm2165 = vc.u32 %v2163, %v2159
    %v2166 = vsel %vm2165, 1, 0
    %v2167 = vadd.s32 %v2163, %v2159
    %v2168 = vadd.s32 %v2164, %v2166
    %v2169 = vadd.s32 %v2168, %v2158
    %v2170 = vadd.s32 %v2169, %v2160
    %v2171 = vand.u32 %v2148, 65535
    %v2172 = vshrl.u32 %v2148, 16
    %v2173 = vand.u32 %v2143, 65535
    %v2174 = vshrl.u32 %v2143, 16
    %v2175 = vmul.u32 %v2171, %v2173
    %v2176 = vmul.u32 %v2171, %v2174
    %v2177 = vmul.u32 %v2172, %v2173
    %v2178 = vmul.u32 %v2172, %v2174
    %v2179 = vshll.u32 %v2176, 16
    %v2180 = vshrl.u32 %v2176, 16
    %v2181 = vshll.u32 %v2177, 16
    %v2182 = vshrl.u32 %v2177, 16
    %vm2183 = vc.u32 %v2175, %v2179
    %v2184 = vsel %vm2183, 1, 0
    %v2185 = vadd.s32 %v2175, %v2179
    %v2186 = vadd.s32 %v2178, %v2184
    %vm2187 = vc.u32 %v2185, %v2181
    %v2188 = vsel %vm2187, 1, 0
    %v2189 = vadd.s32 %v2185, %v2181
    %v2190 = vadd.s32 %v2186, %v2188
    %v2191 = vadd.s32 %v2190, %v2180
    %v2192 = vadd.s32 %v2191, %v2182
    %v2193 = vmul.u32 %v2148, %v2139
    %v2194 = vadd.s32 %v2170, %v2189
    %vm2195 = vc.u32 %v2170, %v2189
    %v2196 = vadd.s32 %v2192, 1
    %v2197 = vsel %vm2195, %v2196, %v2192
    %v2198 = vadd.s32 %v2193, %v2197
    %v2199 = vadd.s32 %v2198, 536870912
    %v2200 = vshrl.u32 %v2199, 30
    %v2201 = vshll.u32 %v2200, 30
    %v2202 = vsub.s32 %v2198, %v2201
    %vm2203 = vcmp.lt.s32.totalorder %v2202, 0
    %v2204 = vsub.s32 0, %v2202
    %v2205 = vsel %vm2203, %v2204, %v2202
    %v2206 = vclz %v2205
    %v2207 = vsub.s32 %v2206, 2
    %vm2208 = vcmp.gt.s32.totalorder 0, %v2207
    %v2209 = vsel %vm2208, 0, %v2207
    %v2210 = vsub.s32 32, %v2209
    %v2211 = vshll.u32 %v2202, %v2209
    %v2212 = vshrl.u32 %v2194, %v2210
    %v2213 = vor.u32 %v2211, %v2212
    %v2214 = vsub.s32 4294967266, %v2209
    %v2215 = vadd.s32 %v2214, 127
    %v2216 = vshll.u32 %v2215, 23
    %v2217 = vor.u32 4788187, %v2216
    %v2218 = vand.u32 2147483647, %v2217
    %v2220 = vcvt.s32.f32 %v2213
    %v2221 = vmul.f32 %v2220, %v2218
    %v2222 = vxor.u32 %v2221, 2147483648
    %v2223 = vsel %vm2102, %v2222, %v2221
    %v2224 = vsub.s32 4, %v2200
    %v2225 = vsel %vm2102, %v2224, %v2200
    %v2226 = vsel %vm2101, %v1915, %v2223
    %v2227 = vsel %vm2101, 0, %v2225
    %v2228 = vmul.f32 %v2226, %v2226
    %v2229 = vmul.f32 %v2228, -0.001358992
    %v2230 = vadd.f32 %v2229, 0.041655596
    %v2231 = vmul.f32 %v2228, %v2230
    %v2232 = vadd.f32 %v2231, -0.4999988
    %v2233 = vmul.f32 %v2228, %v2232
    %v2234 = vadd.f32 1.0, %v2233
    %v2235 = vmul.f32 %v2226, %v2226
    %v2236 = vmul.f32 %v2235, -0.00019511016
    %v2237 = vadd.f32 %v2236, 0.008332121
    %v2238 = vmul.f32 %v2235, %v2237
    %v2239 = vadd.f32 %v2238, -0.16666654
    %v2240 = vmul.f32 %v2235, %v2239
    %v2241 = vadd.f32 %v2240, 1.0
    %v2242 = vmul.f32 %v2241, %v2226
    %vm2243 = vweird.f32 %v1915
    %v2244 = vadd.s32 %v2227, 3
    %v2245 = vand.u32 %v2244, 3
    %vm2246 = vcmp.lt.s32.totalorder %v2245, 2
    %vm2247 = vcmp.eq.s32.totalorder %v2245, 0
    %v2248 = vxor.u32 %v2242, 2147483648
    %v2249 = vsel %vm2247, %v2234, %v2248
    %vm2250 = vcmp.eq.s32.totalorder %v2245, 2
    %v2251 = vxor.u32 %v2234, 2147483648
    %v2252 = vsel %vm2250, %v2251, %v2242
    %v2253 = vsel %vm2246, %v2249, %v2252
    %v2254 = vsel %vm2243, nan, %v2253
    %v2255 = vand.u32 2147483647, %v1941
    %vm2256 = vcmp.le.f32.partialorder %v2255, 0.7853982
    %vm2257 = vcmp.lt.s32.totalorder %v1941, 0
    %v2258 = vand.u32 %v1941, 2139095040
    %v2259 = vshrl.u32 %v2258, 23
    %v2260 = vsub.s32 %v2259, 127
    %v2261 = vand.u32 2147483647, %v1941
    %v2262 = vand.u32 %v2261, 8388607
    %v2263 = vor.u32 %v2262, 8388608
    %v2264 = vsub.s32 0, %v2263
    %v2265 = vadd.s32 %v2260, 1
    %vm2266 = vcmp.gt.s32.totalorder %v2265, 0
    %v2267 = vsel %vm2266, %v2265, 0
    %v2268 = vshrl.u32 %v2267, 5
    %v2269 = vand.u32 %v2267, 31
    %v2270 = vsub.s32 32, %v2269
    %v2271 = vshrl.u32 683565275, %v2270
    %v2272 = vshll.u32 683565275, %v2269
    %v2273 = vshrl.u32 2475754826, %v2270
    %v2274 = vor.u32 %v2272, %v2273
    %v2275 = vshll.u32 2475754826, %v2269
    %v2276 = vshrl.u32 2131351028, %v2270
    %v2277 = vor.u32 %v2275, %v2276
    %v2278 = vshll.u32 2131351028, %v2269
    %v2279 = vshrl.u32 2102212464, %v2270
    %v2280 = vor.u32 %v2278, %v2279
    %v2281 = vshll.u32 2102212464, %v2269
    %v2282 = vshrl.u32 920167782, %v2270
    %v2283 = vor.u32 %v2281, %v2282
    %v2284 = vshll.u32 920167782, %v2269
    %v2285 = vshrl.u32 1326507024, %v2270
    %v2286 = vor.u32 %v2284, %v2285
    %vm2287 = vcmp.lt.s32.totalorder %v2268, 1
    %vm2288 = vcmp.lt.s32.totalorder %v2268, 2
    %vm2289 = vcmp.lt.s32.totalorder %v2268, 3
    %vm2290 = vcmp.lt.s32.totalorder %v2268, 4
    %v2291 = vsel %vm2287, %v2271, %v2274
    %v2292 = vsel %vm2290, %v2280, 2102212464
    %v2293 = vsel %vm2289, %v2277, %v2292
    %v2294 = vsel %vm2288, %v2291, %v2293
    %v2295 = vsel %vm2287, %v2274, %v2277
    %v2296 = vsel %vm2290, %v2283, 920167782
    %v2297 = vsel %vm2289, %v2280, %v2296
    %v2298 = vsel %vm2288, %v2295, %v2297
    %v2299 = vsel %vm2287, %v2277, %v2280
    %v2300 = vsel %vm2290, %v2286, 1326507024
    %v2301 = vsel %vm2289, %v2283, %v2300
    %v2302 = vsel %vm2288, %v2299, %v2301
    %v2303 = vshll.u32 %v2263, 8
    %v2304 = vand.u32 %v2303, 65535
    %v2305 = vshrl.u32 %v2303, 16
    %v2306 = vand.u32 %v2302, 65535
    %v2307 = vshrl.u32 %v2302, 16
    %v2308 = vmul.u32 %v2304, %v2306
    %v2309 = vmul.u32 %v2304, %v2307
    %v2310 = vmul.u32 %v2305, %v2306
    %v2311 = vmul.u32 %v2305, %v2307
    %v2312 = vshll.u32 %v2309, 16
    %v2313 = vshrl.u32 %v2309, 16
    %v2314 = vshll.u32 %v2310, 16
    %v2315 = vshrl.u32 %v2310, 16
    %vm2316 = vc.u32 %v2308, %v2312
    %v2317 = vsel %vm2316, 1, 0
    %v2318 = vadd.s32 %v2308, %v2312
    %v2319 = vadd.s32 %v2311, %v2317
    %vm2320 = vc.u32 %v2318, %v2314
    %v2321 = vsel %vm2320, 1, 0
    %v2322 = vadd.s32 %v2318, %v2314
    %v2323 = vadd.s32 %v2319, %v2321
    %v2324 = vadd.s32 %v2323, %v2313
    %v2325 = vadd.s32 %v2324, %v2315
    %v2326 = vand.u32 %v2303, 65535
    %v2327 = vshrl.u32 %v2303, 16
    %v2328 = vand.u32 %v2298, 65535
    %v2329 = vshrl.u32 %v2298, 16
    %v2330 = vmul.u32 %v2326, %v2328
    %v2331 = vmul.u32 %v2326, %v2329
    %v2332 = vmul.u32 %v2327, %v2328
    %v2333 = vmul.u32 %v2327, %v2329
    %v2334 = vshll.u32 %v2331, 16
    %v2335 = vshrl.u32 %v2331, 16
    %v2336 = vshll.u32 %v2332, 16
    %v2337 = vshrl.u32 %v2332, 16
    %vm2338 = vc.u32 %v2330, %v2334
    %v2339 = vsel %vm2338, 1, 0
    %v2340 = vadd.s32 %v2330, %v2334
    %v2341 = vadd.s32 %v2333, %v2339
    %vm2342 = vc.u32 %v2340, %v2336
    %v2343 = vsel %vm2342, 1, 0
    %v2344 = vadd.s32 %v2340, %v2336
    %v2345 = vadd.s32 %v2341, %v2343
    %v2346 = vadd.s32 %v2345, %v2335
    %v2347 = vadd.s32 %v2346, %v2337
    %v2348 = vmul.u32 %v2303, %v2294
    %v2349 = vadd.s32 %v2325, %v2344
    %vm2350 = vc.u32 %v2325, %v2344
    %v2351 = vadd.s32 %v2347, 1
    %v2352 = vsel %vm2350, %v2351, %v2347
    %v2353 = vadd.s32 %v2348, %v2352
    %v2354 = vadd.s32 %v2353, 536870912
    %v2355 = vshrl.u32 %v2354, 30
    %v2356 = vshll.u32 %v2355, 30
    %v2357 = vsub.s32 %v2353, %v2356
    %vm2358 = vcmp.lt.s32.totalorder %v2357, 0
    %v2359 = vsub.s32 0, %v2357
    %v2360 = vsel %vm2358, %v2359, %v2357
    %v2361 = vclz %v2360
    %v2362 = vsub.s32 %v2361, 2
    %vm2363 = vcmp.gt.s32.totalorder 0, %v2362
    %v2364 = vsel %vm2363, 0, %v2362
    %v2365 = vsub.s32 32, %v2364
    %v2366 = vshll.u32 %v2357, %v2364
    %v2367 = vshrl.u32 %v2349, %v2365
    %v2368 = vor.u32 %v2366, %v2367
    %v2369 = vsub.s32 4294967266, %v2364
    %v2370 = vadd.s32 %v2369, 127
    %v2371 = vshll.u32 %v2370, 23
    %v2372 = vor.u32 4788187, %v2371
    %v2373 = vand.u32 2147483647, %v2372
    %v2375 = vcvt.s32.f32 %v2368
    %v2376 = vmul.f32 %v2375, %v2373
    %v2377 = vxor.u32 %v2376, 2147483648
    %v2378 = vsel %vm2257, %v2377, %v2376
    %v2379 = vsub.s32 4, %v2355
    %v2380 = vsel %vm2257, %v2379, %v2355
    %v2381 = vsel %vm2256, %v1941, %v2378
    %v2382 = vsel %vm2256, 0, %v2380
    %v2383 = vmul.f32 %v2381, %v2381
    %v2384 = vmul.f32 %v2383, -0.001358992
    %v2385 = vadd.f32 %v2384, 0.041655596
    %v2386 = vmul.f32 %v2383, %v2385
    %v2387 = vadd.f32 %v2386, -0.4999988
    %v2388 = vmul.f32 %v2383, %v2387
    %v2389 = vadd.f32 1.0, %v2388
    %v2390 = vmul.f32 %v2381, %v2381
    %v2391 = vmul.f32 %v2390, -0.00019511016
    %v2392 = vadd.f32 %v2391, 0.008332121
    %v2393 = vmul.f32 %v2390, %v2392
    %v2394 = vadd.f32 %v2393, -0.16666654
    %v2395 = vmul.f32 %v2390, %v2394
    %v2396 = vadd.f32 %v2395, 1.0
    %v2397 = vmul.f32 %v2396, %v2381
    %vm2398 = vweird.f32 %v1941
    %v2399 = vadd.s32 %v2382, 3
    %v2400 = vand.u32 %v2399, 3
    %vm2401 = vcmp.lt.s32.totalorder %v2400, 2
    %vm2402 = vcmp.eq.s32.totalorder %v2400, 0
    %v2403 = vxor.u32 %v2397, 2147483648
    %v2404 = vsel %vm2402, %v2389, %v2403
    %vm2405 = vcmp.eq.s32.totalorder %v2400, 2
    %v2406 = vxor.u32 %v2389, 2147483648
    %v2407 = vsel %vm2405, %v2406, %v2397
    %v2408 = vsel %vm2401, %v2404, %v2407
    %v2409 = vsel %vm2398, nan, %v2408
    %v2410 = vand.u32 2147483647, %v1967
    %vm2411 = vcmp.le.f32.partialorder %v2410, 0.7853982
    %vm2412 = vcmp.lt.s32.totalorder %v1967, 0
    %v2413 = vand.u32 %v1967, 2139095040
    %v2414 = vshrl.u32 %v2413, 23
    %v2415 = vsub.s32 %v2414, 127
    %v2416 = vand.u32 2147483647, %v1967
    %v2417 = vand.u32 %v2416, 8388607
    %v2418 = vor.u32 %v2417, 8388608
    %v2419 = vsub.s32 0, %v2418
    %v2420 = vadd.s32 %v2415, 1
    %vm2421 = vcmp.gt.s32.totalorder %v2420, 0
    %v2422 = vsel %vm2421, %v2420, 0
    %v2423 = vshrl.u32 %v2422, 5
    %v2424 = vand.u32 %v2422, 31
    %v2425 = vsub.s32 32, %v2424
    %v2426 = vshrl.u32 683565275, %v2425
    %v2427 = vshll.u32 683565275, %v2424
    %v2428 = vshrl.u32 2475754826, %v2425
    %v2429 = vor.u32 %v2427, %v2428
    %v2430 = vshll.u32 2475754826, %v2424
    %v2431 = vshrl.u32 2131351028, %v2425
    %v2432 = vor.u32 %v2430, %v2431
    %v2433 = vshll.u32 2131351028, %v2424
    %v2434 = vshrl.u32 2102212464, %v2425
    %v2435 = vor.u32 %v2433, %v2434
    %v2436 = vshll.u32 2102212464, %v2424
    %v2437 = vshrl.u32 920167782, %v2425
    %v2438 = vor.u32 %v2436, %v2437
    %v2439 = vshll.u32 920167782, %v2424
    %v2440 = vshrl.u32 1326507024, %v2425
    %v2441 = vor.u32 %v2439, %v2440
    %vm2442 = vcmp.lt.s32.totalorder %v2423, 1
    %vm2443 = vcmp.lt.s32.totalorder %v2423, 2
    %vm2444 = vcmp.lt.s32.totalorder %v2423, 3
    %vm2445 = vcmp.lt.s32.totalorder %v2423, 4
    %v2446 = vsel %vm2442, %v2426, %v2429
    %v2447 = vsel %vm2445, %v2435, 2102212464
    %v2448 = vsel %vm2444, %v2432, %v2447
    %v2449 = vsel %vm2443, %v2446, %v2448
    %v2450 = vsel %vm2442, %v2429, %v2432
    %v2451 = vsel %vm2445, %v2438, 920167782
    %v2452 = vsel %vm2444, %v2435, %v2451
    %v2453 = vsel %vm2443, %v2450, %v2452
    %v2454 = vsel %vm2442, %v2432, %v2435
    %v2455 = vsel %vm2445, %v2441, 1326507024
    %v2456 = vsel %vm2444, %v2438, %v2455
    %v2457 = vsel %vm2443, %v2454, %v2456
    %v2458 = vshll.u32 %v2418, 8
    %v2459 = vand.u32 %v2458, 65535
    %v2460 = vshrl.u32 %v2458, 16
    %v2461 = vand.u32 %v2457, 65535
    %v2462 = vshrl.u32 %v2457, 16
    %v2463 = vmul.u32 %v2459, %v2461
    %v2464 = vmul.u32 %v2459, %v2462
    %v2465 = vmul.u32 %v2460, %v2461
    %v2466 = vmul.u32 %v2460, %v2462
    %v2467 = vshll.u32 %v2464, 16
    %v2468 = vshrl.u32 %v2464, 16
    %v2469 = vshll.u32 %v2465, 16
    %v2470 = vshrl.u32 %v2465, 16
    %vm2471 = vc.u32 %v2463, %v2467
    %v2472 = vsel %vm2471, 1, 0
    %v2473 = vadd.s32 %v2463, %v2467
    %v2474 = vadd.s32 %v2466, %v2472
    %vm2475 = vc.u32 %v2473, %v2469
    %v2476 = vsel %vm2475, 1, 0
    %v2477 = vadd.s32 %v2473, %v2469
    %v2478 = vadd.s32 %v2474, %v2476
    %v2479 = vadd.s32 %v2478, %v2468
    %v2480 = vadd.s32 %v2479, %v2470
    %v2481 = vand.u32 %v2458, 65535
    %v2482 = vshrl.u32 %v2458, 16
    %v2483 = vand.u32 %v2453, 65535
    %v2484 = vshrl.u32 %v2453, 16
    %v2485 = vmul.u32 %v2481, %v2483
    %v2486 = vmul.u32 %v2481, %v2484
    %v2487 = vmul.u32 %v2482, %v2483
    %v2488 = vmul.u32 %v2482, %v2484
    %v2489 = vshll.u32 %v2486, 16
    %v2490 = vshrl.u32 %v2486, 16
    %v2491 = vshll.u32 %v2487, 16
    %v2492 = vshrl.u32 %v2487, 16
    %vm2493 = vc.u32 %v2485, %v2489
    %v2494 = vsel %vm2493, 1, 0
    %v2495 = vadd.s32 %v2485, %v2489
    %v2496 = vadd.s32 %v2488, %v2494
    %vm2497 = vc.u32 %v2495, %v2491
    %v2498 = vsel %vm2497, 1, 0
    %v2499 = vadd.s32 %v2495, %v2491
    %v2500 = vadd.s32 %v2496, %v2498
    %v2501 = vadd.s32 %v2500, %v2490
    %v2502 = vadd.s32 %v2501, %v2492
    %v2503 = vmul.u32 %v2458, %v2449
    %v2504 = vadd.s32 %v2480, %v2499
    %vm2505 = vc.u32 %v2480, %v2499
    %v2506 = vadd.s32 %v2502, 1
    %v2507 = vsel %vm2505, %v2506, %v2502
    %v2508 = vadd.s32 %v2503, %v2507
    %v2509 = vadd.s32 %v2508, 536870912
    %v2510 = vshrl.u32 %v2509, 30
    %v2511 = vshll.u32 %v2510, 30
    %v2512 = vsub.s32 %v2508, %v2511
    %vm2513 = vcmp.lt.s32.totalorder %v2512, 0
    %v2514 = vsub.s32 0, %v2512
    %v2515 = vsel %vm2513, %v2514, %v2512
    %v2516 = vclz %v2515
    %v2517 = vsub.s32 %v2516, 2
    %vm2518 = vcmp.gt.s32.totalorder 0, %v2517
    %v2519 = vsel %vm2518, 0, %v2517
    %v2520 = vsub.s32 32, %v2519
    %v2521 = vshll.u32 %v2512, %v2519
    %v2522 = vshrl.u32 %v2504, %v2520
    %v2523 = vor.u32 %v2521, %v2522
    %v2524 = vsub.s32 4294967266, %v2519
    %v2525 = vadd.s32 %v2524, 127
    %v2526 = vshll.u32 %v2525, 23
    %v2527 = vor.u32 4788187, %v2526
    %v2528 = vand.u32 2147483647, %v2527
    %v2530 = vcvt.s32.f32 %v2523
    %v2531 = vmul.f32 %v2530, %v2528
    %v2532 = vxor.u32 %v2531, 2147483648
    %v2533 = vsel %vm2412, %v2532, %v2531
    %v2534 = vsub.s32 4, %v2510
    %v2535 = vsel %vm2412, %v2534, %v2510
    %v2536 = vsel %vm2411, %v1967, %v2533
    %v2537 = vsel %vm2411, 0, %v2535
    %v2538 = vmul.f32 %v2536, %v2536
    %v2539 = vmul.f32 %v2538, -0.001358992
    %v2540 = vadd.f32 %v2539, 0.041655596
    %v2541 = vmul.f32 %v2538, %v2540
    %v2542 = vadd.f32 %v2541, -0.4999988
    %v2543 = vmul.f32 %v2538, %v2542
    %v2544 = vadd.f32 1.0, %v2543
    %v2545 = vmul.f32 %v2536, %v2536
    %v2546 = vmul.f32 %v2545, -0.00019511016
    %v2547 = vadd.f32 %v2546, 0.008332121
    %v2548 = vmul.f32 %v2545, %v2547
    %v2549 = vadd.f32 %v2548, -0.16666654
    %v2550 = vmul.f32 %v2545, %v2549
    %v2551 = vadd.f32 %v2550, 1.0
    %v2552 = vmul.f32 %v2551, %v2536
    %vm2553 = vweird.f32 %v1967
    %v2554 = vadd.s32 %v2537, 3
    %v2555 = vand.u32 %v2554, 3
    %vm2556 = vcmp.lt.s32.totalorder %v2555, 2
    %vm2557 = vcmp.eq.s32.totalorder %v2555, 0
    %v2558 = vxor.u32 %v2552, 2147483648
    %v2559 = vsel %vm2557, %v2544, %v2558
    %vm2560 = vcmp.eq.s32.totalorder %v2555, 2
    %v2561 = vxor.u32 %v2544, 2147483648
    %v2562 = vsel %vm2560, %v2561, %v2552
    %v2563 = vsel %vm2556, %v2559, %v2562
    %v2564 = vsel %vm2553, nan, %v2563
    %v2565 = vand.u32 2147483647, %v1993
    %vm2566 = vcmp.le.f32.partialorder %v2565, 0.7853982
    %vm2567 = vcmp.lt.s32.totalorder %v1993, 0
    %v2568 = vand.u32 %v1993, 2139095040
    %v2569 = vshrl.u32 %v2568, 23
    %v2570 = vsub.s32 %v2569, 127
    %v2571 = vand.u32 2147483647, %v1993
    %v2572 = vand.u32 %v2571, 8388607
    %v2573 = vor.u32 %v2572, 8388608
    %v2574 = vsub.s32 0, %v2573
    %v2575 = vadd.s32 %v2570, 1
    %vm2576 = vcmp.gt.s32.totalorder %v2575, 0
    %v2577 = vsel %vm2576, %v2575, 0
    %v2578 = vshrl.u32 %v2577, 5
    %v2579 = vand.u32 %v2577, 31
    %v2580 = vsub.s32 32, %v2579
    %v2581 = vshrl.u32 683565275, %v2580
    %v2582 = vshll.u32 683565275, %v2579
    %v2583 = vshrl.u32 2475754826, %v2580
    %v2584 = vor.u32 %v2582, %v2583
    %v2585 = vshll.u32 2475754826, %v2579
    %v2586 = vshrl.u32 2131351028, %v2580
    %v2587 = vor.u32 %v2585, %v2586
    %v2588 = vshll.u32 2131351028, %v2579
    %v2589 = vshrl.u32 2102212464, %v2580
    %v2590 = vor.u32 %v2588, %v2589
    %v2591 = vshll.u32 2102212464, %v2579
    %v2592 = vshrl.u32 920167782, %v2580
    %v2593 = vor.u32 %v2591, %v2592
    %v2594 = vshll.u32 920167782, %v2579
    %v2595 = vshrl.u32 1326507024, %v2580
    %v2596 = vor.u32 %v2594, %v2595
    %vm2597 = vcmp.lt.s32.totalorder %v2578, 1
    %vm2598 = vcmp.lt.s32.totalorder %v2578, 2
    %vm2599 = vcmp.lt.s32.totalorder %v2578, 3
    %vm2600 = vcmp.lt.s32.totalorder %v2578, 4
    %v2601 = vsel %vm2597, %v2581, %v2584
    %v2602 = vsel %vm2600, %v2590, 2102212464
    %v2603 = vsel %vm2599, %v2587, %v2602
    %v2604 = vsel %vm2598, %v2601, %v2603
    %v2605 = vsel %vm2597, %v2584, %v2587
    %v2606 = vsel %vm2600, %v2593, 920167782
    %v2607 = vsel %vm2599, %v2590, %v2606
    %v2608 = vsel %vm2598, %v2605, %v2607
    %v2609 = vsel %vm2597, %v2587, %v2590
    %v2610 = vsel %vm2600, %v2596, 1326507024
    %v2611 = vsel %vm2599, %v2593, %v2610
    %v2612 = vsel %vm2598, %v2609, %v2611
    %v2613 = vshll.u32 %v2573, 8
    %v2614 = vand.u32 %v2613, 65535
    %v2615 = vshrl.u32 %v2613, 16
    %v2616 = vand.u32 %v2612, 65535
    %v2617 = vshrl.u32 %v2612, 16
    %v2618 = vmul.u32 %v2614, %v2616
    %v2619 = vmul.u32 %v2614, %v2617
    %v2620 = vmul.u32 %v2615, %v2616
    %v2621 = vmul.u32 %v2615, %v2617
    %v2622 = vshll.u32 %v2619, 16
    %v2623 = vshrl.u32 %v2619, 16
    %v2624 = vshll.u32 %v2620, 16
    %v2625 = vshrl.u32 %v2620, 16
    %vm2626 = vc.u32 %v2618, %v2622
    %v2627 = vsel %vm2626, 1, 0
    %v2628 = vadd.s32 %v2618, %v2622
    %v2629 = vadd.s32 %v2621, %v2627
    %vm2630 = vc.u32 %v2628, %v2624
    %v2631 = vsel %vm2630, 1, 0
    %v2632 = vadd.s32 %v2628, %v2624
    %v2633 = vadd.s32 %v2629, %v2631
    %v2634 = vadd.s32 %v2633, %v2623
    %v2635 = vadd.s32 %v2634, %v2625
    %v2636 = vand.u32 %v2613, 65535
    %v2637 = vshrl.u32 %v2613, 16
    %v2638 = vand.u32 %v2608, 65535
    %v2639 = vshrl.u32 %v2608, 16
    %v2640 = vmul.u32 %v2636, %v2638
    %v2641 = vmul.u32 %v2636, %v2639
    %v2642 = vmul.u32 %v2637, %v2638
    %v2643 = vmul.u32 %v2637, %v2639
    %v2644 = vshll.u32 %v2641, 16
    %v2645 = vshrl.u32 %v2641, 16
    %v2646 = vshll.u32 %v2642, 16
    %v2647 = vshrl.u32 %v2642, 16
    %vm2648 = vc.u32 %v2640, %v2644
    %v2649 = vsel %vm2648, 1, 0
    %v2650 = vadd.s32 %v2640, %v2644
    %v2651 = vadd.s32 %v2643, %v2649
    %vm2652 = vc.u32 %v2650, %v2646
    %v2653 = vsel %vm2652, 1, 0
    %v2654 = vadd.s32 %v2650, %v2646
    %v2655 = vadd.s32 %v2651, %v2653
    %v2656 = vadd.s32 %v2655, %v2645
    %v2657 = vadd.s32 %v2656, %v2647
    %v2658 = vmul.u32 %v2613, %v2604
    %v2659 = vadd.s32 %v2635, %v2654
    %vm2660 = vc.u32 %v2635, %v2654
    %v2661 = vadd.s32 %v2657, 1
    %v2662 = vsel %vm2660, %v2661, %v2657
    %v2663 = vadd.s32 %v2658, %v2662
    %v2664 = vadd.s32 %v2663, 536870912
    %v2665 = vshrl.u32 %v2664, 30
    %v2666 = vshll.u32 %v2665, 30
    %v2667 = vsub.s32 %v2663, %v2666
    %vm2668 = vcmp.lt.s32.totalorder %v2667, 0
    %v2669 = vsub.s32 0, %v2667
    %v2670 = vsel %vm2668, %v2669, %v2667
    %v2671 = vclz %v2670
    %v2672 = vsub.s32 %v2671, 2
    %vm2673 = vcmp.gt.s32.totalorder 0, %v2672
    %v2674 = vsel %vm2673, 0, %v2672
    %v2675 = vsub.s32 32, %v2674
    %v2676 = vshll.u32 %v2667, %v2674
    %v2677 = vshrl.u32 %v2659, %v2675
    %v2678 = vor.u32 %v2676, %v2677
    %v2679 = vsub.s32 4294967266, %v2674
    %v2680 = vadd.s32 %v2679, 127
    %v2681 = vshll.u32 %v2680, 23
    %v2682 = vor.u32 4788187, %v2681
    %v2683 = vand.u32 2147483647, %v2682
    %v2685 = vcvt.s32.f32 %v2678
    %v2686 = vmul.f32 %v2685, %v2683
    %v2687 = vxor.u32 %v2686, 2147483648
    %v2688 = vsel %vm2567, %v2687, %v2686
    %v2689 = vsub.s32 4, %v2665
    %v2690 = vsel %vm2567, %v2689, %v2665
    %v2691 = vsel %vm2566, %v1993, %v2688
    %v2692 = vsel %vm2566, 0, %v2690
    %v2693 = vmul.f32 %v2691, %v2691
    %v2694 = vmul.f32 %v2693, -0.001358992
    %v2695 = vadd.f32 %v2694, 0.041655596
    %v2696 = vmul.f32 %v2693, %v2695
    %v2697 = vadd.f32 %v2696, -0.4999988
    %v2698 = vmul.f32 %v2693, %v2697
    %v2699 = vadd.f32 1.0, %v2698
    %v2700 = vmul.f32 %v2691, %v2691
    %v2701 = vmul.f32 %v2700, -0.00019511016
    %v2702 = vadd.f32 %v2701, 0.008332121
    %v2703 = vmul.f32 %v2700, %v2702
    %v2704 = vadd.f32 %v2703, -0.16666654
    %v2705 = vmul.f32 %v2700, %v2704
    %v2706 = vadd.f32 %v2705, 1.0
    %v2707 = vmul.f32 %v2706, %v2691
    %vm2708 = vweird.f32 %v1993
    %v2709 = vadd.s32 %v2692, 3
    %v2710 = vand.u32 %v2709, 3
    %vm2711 = vcmp.lt.s32.totalorder %v2710, 2
    %vm2712 = vcmp.eq.s32.totalorder %v2710, 0
    %v2713 = vxor.u32 %v2707, 2147483648
    %v2714 = vsel %vm2712, %v2699, %v2713
    %vm2715 = vcmp.eq.s32.totalorder %v2710, 2
    %v2716 = vxor.u32 %v2699, 2147483648
    %v2717 = vsel %vm2715, %v2716, %v2707
    %v2718 = vsel %vm2711, %v2714, %v2717
    %v2719 = vsel %vm2708, nan, %v2718
    %v2720 = vadd.f32 %v2254, %v2019
    %v2721 = vadd.f32 %v2409, %v2045
    %v2722 = vadd.f32 %v2564, %v2071
    %v2723 = vadd.f32 %v2719, %v2097
    %v2724 = vmax.f32 %v2720, 0.0
    %v2725 = vmax.f32 %v2721, 0.0
    %v2726 = vmax.f32 %v2722, 0.0
    %v2727 = vmax.f32 %v2723, 0.0
    %v2728 = vpack.c.bf16 %v2724, %v2724
    %v2729 = vpack.c.bf16 %v2725, %v2725
    %v2730 = vpack.c.bf16 %v2726, %v2726
    %v2731 = vpack.c.bf16 %v2727, %v2727
    %v2732 = vld [vmem:[#allocation10] sm:$0xf]
    %v2733 = vld [vmem:[#allocation10 + $0x4] sm:$0xf]
    %v2734 = vld [vmem:[#allocation10 + $0x8] sm:$0xf]
    %v2735 = vld [vmem:[#allocation10 + $0xc] sm:$0xf]
    %v2736 = vld [vmem:[#allocation10 + $0x10] sm:$0xf]
    %v2737 = vld [vmem:[#allocation10 + $0x14] sm:$0xf]
    %v2738 = vld [vmem:[#allocation10 + $0x18] sm:$0xf]
    %v2739 = vld [vmem:[#allocation10 + $0x1c] sm:$0xf]
    %v2740 = vld [vmem:[#allocation10 + $0x20] sm:$0xf]
    %v2741 = vld [vmem:[#allocation10 + $0x24] sm:$0xf]
    %v2742 = vld [vmem:[#allocation10 + $0x28] sm:$0xf]
    %v2743 = vld [vmem:[#allocation10 + $0x2c] sm:$0xf]
    %v2744 = vld [vmem:[#allocation10 + $0x30] sm:$0xf]
    %v2745 = vld [vmem:[#allocation10 + $0x34] sm:$0xf]
    %v2746 = vld [vmem:[#allocation10 + $0x38] sm:$0xf]
    %v2747 = vld [vmem:[#allocation10 + $0x3c] sm:$0xf]
    %v2748 = vld [vmem:[#allocation10 + $0x40] sm:$0xf]
    %v2749 = vld [vmem:[#allocation10 + $0x44] sm:$0xf]
    %v2750 = vld [vmem:[#allocation10 + $0x48] sm:$0xf]
    %v2751 = vld [vmem:[#allocation10 + $0x4c] sm:$0xf]
    %v2752 = vld [vmem:[#allocation10 + $0x50] sm:$0xf]
    %v2753 = vld [vmem:[#allocation10 + $0x54] sm:$0xf]
    %v2754 = vld [vmem:[#allocation10 + $0x58] sm:$0xf]
    %v2755 = vld [vmem:[#allocation10 + $0x5c] sm:$0xf]
    %v2756 = vld [vmem:[#allocation10 + $0x60] sm:$0xf]
    %v2757 = vld [vmem:[#allocation10 + $0x64] sm:$0xf]
    %v2758 = vld [vmem:[#allocation10 + $0x68] sm:$0xf]
    %v2759 = vld [vmem:[#allocation10 + $0x6c] sm:$0xf]
    %v2760 = vld [vmem:[#allocation10 + $0x70] sm:$0xf]
    %v2761 = vld [vmem:[#allocation10 + $0x74] sm:$0xf]
    %v2762 = vld [vmem:[#allocation10 + $0x78] sm:$0xf]
    %v2763 = vld [vmem:[#allocation10 + $0x7c] sm:$0xf]
    %v2764 = vld [vmem:[#allocation10 + $0x80] sm:$0xf]
    %v2765 = vld [vmem:[#allocation10 + $0x84] sm:$0xf]
    %v2766 = vld [vmem:[#allocation10 + $0x88] sm:$0xf]
    %v2767 = vld [vmem:[#allocation10 + $0x8c] sm:$0xf]
    %v2768 = vld [vmem:[#allocation10 + $0x90] sm:$0xf]
    %v2769 = vld [vmem:[#allocation10 + $0x94] sm:$0xf]
    %v2770 = vld [vmem:[#allocation10 + $0x98] sm:$0xf]
    %v2771 = vld [vmem:[#allocation10 + $0x9c] sm:$0xf]
    %v2772 = vld [vmem:[#allocation10 + $0xa0] sm:$0xf]
    %v2773 = vld [vmem:[#allocation10 + $0xa4] sm:$0xf]
    %v2774 = vld [vmem:[#allocation10 + $0xa8] sm:$0xf]
    %v2775 = vld [vmem:[#allocation10 + $0xac] sm:$0xf]
    %v2776 = vld [vmem:[#allocation10 + $0xb0] sm:$0xf]
    %v2777 = vld [vmem:[#allocation10 + $0xb4] sm:$0xf]
    %v2778 = vld [vmem:[#allocation10 + $0xb8] sm:$0xf]
    %v2779 = vld [vmem:[#allocation10 + $0xbc] sm:$0xf]
    %v2780 = vld [vmem:[#allocation10 + $0xc0] sm:$0xf]
    %v2781 = vld [vmem:[#allocation10 + $0xc4] sm:$0xf]
    %v2782 = vld [vmem:[#allocation10 + $0xc8] sm:$0xf]
    %v2783 = vld [vmem:[#allocation10 + $0xcc] sm:$0xf]
    %v2784 = vld [vmem:[#allocation10 + $0xd0] sm:$0xf]
    %v2785 = vld [vmem:[#allocation10 + $0xd4] sm:$0xf]
    %v2786 = vld [vmem:[#allocation10 + $0xd8] sm:$0xf]
    %v2787 = vld [vmem:[#allocation10 + $0xdc] sm:$0xf]
    %v2788 = vld [vmem:[#allocation10 + $0xe0] sm:$0xf]
    %v2789 = vld [vmem:[#allocation10 + $0xe4] sm:$0xf]
    %v2790 = vld [vmem:[#allocation10 + $0xe8] sm:$0xf]
    %v2791 = vld [vmem:[#allocation10 + $0xec] sm:$0xf]
    %v2792 = vld [vmem:[#allocation10 + $0xf0] sm:$0xf]
    %v2793 = vld [vmem:[#allocation10 + $0xf4] sm:$0xf]
    %v2794 = vld [vmem:[#allocation10 + $0xf8] sm:$0xf]
    %v2795 = vld [vmem:[#allocation10 + $0xfc] sm:$0xf]
    %v2796 = vld [vmem:[%s10] sm:$0x1]
    %v2798 = vperm.slane %v2796, 0
    %v2864 = vunpack.c.l.b16 %v2732
    %v2865 = vunpack.c.l.b16 %v2733
    %v2866 = vunpack.c.l.b16 %v2734
    %v2867 = vunpack.c.l.b16 %v2735
    %v2868 = vunpack.c.l.b16 %v2736
    %v2869 = vunpack.c.l.b16 %v2737
    %v2870 = vunpack.c.l.b16 %v2738
    %v2871 = vunpack.c.l.b16 %v2739
    %v2872 = vunpack.c.l.b16 %v2740
    %v2873 = vunpack.c.l.b16 %v2741
    %v2874 = vunpack.c.l.b16 %v2742
    %v2875 = vunpack.c.l.b16 %v2743
    %v2876 = vunpack.c.l.b16 %v2744
    %v2877 = vunpack.c.l.b16 %v2745
    %v2878 = vunpack.c.l.b16 %v2746
    %v2879 = vunpack.c.l.b16 %v2747
    %v2880 = vunpack.c.l.b16 %v2748
    %v2881 = vunpack.c.l.b16 %v2749
    %v2882 = vunpack.c.l.b16 %v2750
    %v2883 = vunpack.c.l.b16 %v2751
    %v2884 = vunpack.c.l.b16 %v2752
    %v2885 = vunpack.c.l.b16 %v2753
    %v2886 = vunpack.c.l.b16 %v2754
    %v2887 = vunpack.c.l.b16 %v2755
    %v2888 = vunpack.c.l.b16 %v2756
    %v2889 = vunpack.c.l.b16 %v2757
    %v2890 = vunpack.c.l.b16 %v2758
    %v2891 = vunpack.c.l.b16 %v2759
    %v2892 = vunpack.c.l.b16 %v2760
    %v2893 = vunpack.c.l.b16 %v2761
    %v2894 = vunpack.c.l.b16 %v2762
    %v2895 = vunpack.c.l.b16 %v2763
    %v2896 = vunpack.c.l.b16 %v2764
    %v2897 = vunpack.c.l.b16 %v2765
    %v2898 = vunpack.c.l.b16 %v2766
    %v2899 = vunpack.c.l.b16 %v2767
    %v2900 = vunpack.c.l.b16 %v2768
    %v2901 = vunpack.c.l.b16 %v2769
    %v2902 = vunpack.c.l.b16 %v2770
    %v2903 = vunpack.c.l.b16 %v2771
    %v2904 = vunpack.c.l.b16 %v2772
    %v2905 = vunpack.c.l.b16 %v2773
    %v2906 = vunpack.c.l.b16 %v2774
    %v2907 = vunpack.c.l.b16 %v2775
    %v2908 = vunpack.c.l.b16 %v2776
    %v2909 = vunpack.c.l.b16 %v2777
    %v2910 = vunpack.c.l.b16 %v2778
    %v2911 = vunpack.c.l.b16 %v2779
    %v2912 = vunpack.c.l.b16 %v2780
    %v2913 = vunpack.c.l.b16 %v2781
    %v2914 = vunpack.c.l.b16 %v2782
    %v2915 = vunpack.c.l.b16 %v2783
    %v2916 = vunpack.c.l.b16 %v2784
    %v2917 = vunpack.c.l.b16 %v2785
    %v2918 = vunpack.c.l.b16 %v2786
    %v2919 = vunpack.c.l.b16 %v2787
    %v2920 = vunpack.c.l.b16 %v2788
    %v2921 = vunpack.c.l.b16 %v2789
    %v2922 = vunpack.c.l.b16 %v2790
    %v2923 = vunpack.c.l.b16 %v2791
    %v2924 = vunpack.c.l.b16 %v2792
    %v2925 = vunpack.c.l.b16 %v2793
    %v2926 = vunpack.c.l.b16 %v2794
    %v2927 = vunpack.c.l.b16 %v2795
    %v2928 = vpack.c.b16 %v2865, %v2864
    %v2929 = vpack.c.b16 %v2867, %v2866
    %v2930 = vpack.c.b16 %v2869, %v2868
    %v2931 = vpack.c.b16 %v2871, %v2870
    %v2932 = vpack.c.b16 %v2873, %v2872
    %v2933 = vpack.c.b16 %v2875, %v2874
    %v2934 = vpack.c.b16 %v2877, %v2876
    %v2935 = vpack.c.b16 %v2879, %v2878
    %v2936 = vpack.c.b16 %v2881, %v2880
    %v2937 = vpack.c.b16 %v2883, %v2882
    %v2938 = vpack.c.b16 %v2885, %v2884
    %v2939 = vpack.c.b16 %v2887, %v2886
    %v2940 = vpack.c.b16 %v2889, %v2888
    %v2941 = vpack.c.b16 %v2891, %v2890
    %v2942 = vpack.c.b16 %v2893, %v2892
    %v2943 = vpack.c.b16 %v2895, %v2894
    %v2944 = vpack.c.b16 %v2897, %v2896
    %v2945 = vpack.c.b16 %v2899, %v2898
    %v2946 = vpack.c.b16 %v2901, %v2900
    %v2947 = vpack.c.b16 %v2903, %v2902
    %v2948 = vpack.c.b16 %v2905, %v2904
    %v2949 = vpack.c.b16 %v2907, %v2906
    %v2950 = vpack.c.b16 %v2909, %v2908
    %v2951 = vpack.c.b16 %v2911, %v2910
    %v2952 = vpack.c.b16 %v2913, %v2912
    %v2953 = vpack.c.b16 %v2915, %v2914
    %v2954 = vpack.c.b16 %v2917, %v2916
    %v2955 = vpack.c.b16 %v2919, %v2918
    %v2956 = vpack.c.b16 %v2921, %v2920
    %v2957 = vpack.c.b16 %v2923, %v2922
    %v2958 = vpack.c.b16 %v2925, %v2924
    %v2959 = vpack.c.b16 %v2927, %v2926
    %2992 = vmatpush.bf16.msra.mxu0 %v2935
    %2993 = vmatpush.bf16.msra.mxu0 %v2934
    %2994 = vmatpush.bf16.msra.mxu0 %v2933
    %2995 = vmatpush.bf16.msra.mxu0 %v2932
    %2996 = vmatpush.bf16.msra.mxu0 %v2931
    %2997 = vmatpush.bf16.msra.mxu0 %v2930
    %2998 = vmatpush.bf16.msra.mxu0 %v2929
    %2999 = vmatpush.bf16.msra.mxu0 %v2928
    %3000 = vmatmul.bf16.gmra.mxu0 %v2728
    %v3001 = vpop.f32.mrf.mxu0
    %v3002 = vadd.f32 %v2798, %v3001
    %v3003 = vpop.f32.mrf.mxu0
    %3004 = vdwg.mxu0
    %3005 = vmatpush.bf16.msra.mxu0 %v2943
    %3006 = vmatpush.bf16.msra.mxu0 %v2942
    %3007 = vmatpush.bf16.msra.mxu0 %v2941
    %3008 = vmatpush.bf16.msra.mxu0 %v2940
    %3009 = vmatpush.bf16.msra.mxu0 %v2939
    %3010 = vmatpush.bf16.msra.mxu0 %v2938
    %3011 = vmatpush.bf16.msra.mxu0 %v2937
    %3012 = vmatpush.bf16.msra.mxu0 %v2936
    %3013 = vmatmul.bf16.gmra.mxu0 %v2729
    %v3014 = vpop.f32.mrf.mxu0
    %v3015 = vadd.f32 %v3002, %v3014
    %v3016 = vpop.f32.mrf.mxu0
    %3017 = vdwg.mxu0
    %3018 = vmatpush.bf16.msra.mxu0 %v2951
    %3019 = vmatpush.bf16.msra.mxu0 %v2950
    %3020 = vmatpush.bf16.msra.mxu0 %v2949
    %3021 = vmatpush.bf16.msra.mxu0 %v2948
    %3022 = vmatpush.bf16.msra.mxu0 %v2947
    %3023 = vmatpush.bf16.msra.mxu0 %v2946
    %3024 = vmatpush.bf16.msra.mxu0 %v2945
    %3025 = vmatpush.bf16.msra.mxu0 %v2944
    %3026 = vmatmul.bf16.gmra.mxu0 %v2730
    %v3027 = vpop.f32.mrf.mxu0
    %v3028 = vadd.f32 %v3015, %v3027
    %v3029 = vpop.f32.mrf.mxu0
    %3030 = vdwg.mxu0
    %3031 = vmatpush.bf16.msra.mxu0 %v2959
    %3032 = vmatpush.bf16.msra.mxu0 %v2958
    %3033 = vmatpush.bf16.msra.mxu0 %v2957
    %3034 = vmatpush.bf16.msra.mxu0 %v2956
    %3035 = vmatpush.bf16.msra.mxu0 %v2955
    %3036 = vmatpush.bf16.msra.mxu0 %v2954
    %3037 = vmatpush.bf16.msra.mxu0 %v2953
    %3038 = vmatpush.bf16.msra.mxu0 %v2952
    %3039 = vmatmul.bf16.gmra.mxu0 %v2731
    %v3040 = vpop.f32.mrf.mxu0
    %v3041 = vadd.f32 %v3028, %v3040
    %v3042 = vpop.f32.mrf.mxu0
    %3043 = vdwg.mxu0
    %3044 = vst [vmem:[#allocation11] sm:$0xff] %v3041
    // Predicated region
    $region66: #{tpu_custom_call.1} parent=1 // pred_check
      _
    $region67: #{tpu_custom_call.1} parent=1 // pred_check_branch
      %3046 = sbr.rel (0) target = $region69
    $region68: #{tpu_custom_call.1} parent=1 // pred_region
      %3048 = vsyncadd [#allocation4], 0
      %s3050 = sshll.u32 [#allocation11], 4
      %s3051 = int_to_ptr.vmem [resolvable:$true] %s3050
      %s3052 = sshll.u32 %s11, 4
      %s3053 = int_to_ptr.hbm [resolvable:$true] %s3052
      %3055 = dma.vmem_to_hbm [thread:$0]  %s3051, 128, %s3053, [#allocation4]
    $region69: #{tpu_custom_call.1} parent=1 // pred_fallthru
      _
    // Predicated region
    $region70: #{tpu_custom_call.1} parent=1 // pred_check
      _
    $region71: #{tpu_custom_call.1} parent=1 // pred_check_branch
      %3057 = sbr.rel (0) target = $region73
    $region72: #{tpu_custom_call.1} parent=1 // pred_region
      %3059 = dma.done [#allocation4], 128
    $region73: #{tpu_custom_call.1} parent=1 // pred_fallthru
      _
    %3060 = vsyncpa [#allocation3], 1
    %3061 = vsyncpa [#allocation6], 1
    %3062 = vsyncpa [#allocation9], 1
    %3063 = vsyncpa [#allocation4], 1

</llo_original>
